<compile_context>
chip_gen: v7x
topology: tpu7x:2x2x1
jax: 0.10.0
libtpu: 0.0.40
codegen_flags: <defaults>
</compile_context>

<pallas_src>
import functools

import jax
import jax.numpy as jnp
from jax.experimental import pallas as pl
from jax.experimental.pallas import tpu as pltpu

embedding_size = 10
hidden_size = 8
input_size = 4
num_class = 4
num_layers = 2  # hard-coded as two explicit layers in the kernel

_VPAD = 8                              # one-hot width, padded so slab rows are 8-aligned
_ROW_EMB = 0                           # rows [0, 8):  emb @ W_ih0^T + b_ih0 + b_hh0 (padded)
_ROW_WHH0 = _VPAD                      # rows [8, 16): W_hh0^T
_ROW_WIH1 = _VPAD + hidden_size        # rows [16,24): W_ih1^T
_ROW_WHH1 = _VPAD + 2 * hidden_size    # rows [24,32): W_hh1^T


def _rnn_kernel(ids_ref, w_ref, wfc_ref, b_ref, out_ref, *, B, T):
    H, C = hidden_size, num_class
    TB = T * B

    # ---------------- preamble: everything here is OFF the serial chain -----
    emb_proj = w_ref[_ROW_EMB:_ROW_EMB + _VPAD, :]            # (8, H), incl. layer-0 biases
    wih1_t = w_ref[_ROW_WIH1:_ROW_WIH1 + H, :]                # (H, H)
    b1 = b_ref[:, 0:H]                                        # (1, H) = b_ih1 + b_hh1
    bfc = b_ref[:, H:H + C]                                    # (1, C)

    # Embedding lookup + layer-0 input projection (+ layer-0 biases) for ALL
    # timesteps at once: one-hot(ids) @ (emb @ W_ih0^T + b0).  Exact in f32.
    ids = ids_ref[...]                                         # (TB, 1) int32, time-major
    oh = jnp.where(ids == jax.lax.broadcasted_iota(jnp.int32, (TB, _VPAD), 1),
                   1.0, 0.0).astype(jnp.float32)               # (TB, 8)
    x_proj = jnp.dot(oh, emb_proj, preferred_element_type=jnp.float32)   # (TB, H)

    # Hoisted loop-invariant values for the VPU matvec (built exactly once).
    col_iota = jax.lax.broadcasted_iota(jnp.int32, (1, H), 1)
    lane_masks = [jnp.where(col_iota == k, 1.0, 0.0).astype(jnp.float32)
                  for k in range(H)]                           # (1, H) each
    w0_rows = [jnp.broadcast_to(w_ref[_ROW_WHH0 + k:_ROW_WHH0 + k + 1, :], (B, H))
               for k in range(H)]                              # row k of W_hh0^T, (B, H)
    w1_rows = [jnp.broadcast_to(w_ref[_ROW_WHH1 + k:_ROW_WHH1 + k + 1, :], (B, H))
               for k in range(H)]                              # row k of W_hh1^T, (B, H)

    def matvec_vpu(h, w_rows):
        # (B,H) @ (H,H) recurrent update on the VPU/XLU: extract h[:,k] with a
        # masked lane-reduce (broadcasts back across lanes for free), multiply
        # by the pre-broadcast weight row, and sum with a log-depth tree.
        # No per-step MXU fill/drain / result-FIFO latency on the serial chain.
        terms = [jnp.sum(h * lane_masks[k], axis=1, keepdims=True) * w_rows[k]
                 for k in range(H)]
        while len(terms) > 1:
            nxt = [terms[i] + terms[i + 1] for i in range(0, len(terms) - 1, 2)]
            if len(terms) % 2:
                nxt.append(terms[-1])
            terms = nxt
        return terms[0]

    # ---------------- layer 0: only tanh(x_t + h1 @ W_hh0^T) on the chain ---
    # Fully unrolled static loop (T is small).
    # TODO(synk): switch to lax.fori_loop(..., unroll=True) writing into a
    # (T*B, H) VMEM scratch if T/B ever grow (live-range / compile-time guard).
    h1 = jnp.zeros((B, H), jnp.float32)
    h1_steps = []
    for t in range(T):
        h1 = jnp.tanh(x_proj[t * B:(t + 1) * B, :] + matvec_vpu(h1, w0_rows))
        h1_steps.append(h1)
    h1_all = jnp.concatenate(h1_steps, axis=0)                 # (TB, H), time-major

    # ---- layer-1 input term for ALL timesteps: one batched dot, off-chain --
    z = jnp.dot(h1_all, wih1_t, preferred_element_type=jnp.float32) + b1   # (TB, H)

    # ---------------- layer 1: only tanh(z_t + h2 @ W_hh1^T) on the chain ---
    h2 = jnp.zeros((B, H), jnp.float32)
    h2_steps = []
    for t in range(T):
        h2 = jnp.tanh(z[t * B:(t + 1) * B, :] + matvec_vpu(h2, w1_rows))
        h2_steps.append(h2)
    h2_all = jnp.concatenate(h2_steps, axis=0)                 # (TB, H), time-major

    # -------- final Linear once; single full-tile store (time-major order) --
    out_ref[...] = (jnp.dot(h2_all, wfc_ref[...], preferred_element_type=jnp.float32)
                    + bfc)


def pack_params(params):
    """One-time packing of the model params into the kernel operand layout.

    Called once at init so none of these tiny concats / transposes sit on the
    per-call path.  Folds emb, W_ih0 and both layer-0 biases into a single
    (8, H) lookup table (rows >= input_size are zero padding so every slab
    section starts on an 8-row boundary)."""
    emb_proj = (params["emb"] @ params["w_ih0"].T
                + params["b_ih0"] + params["b_hh0"])           # (V, H)
    emb_proj = jnp.pad(emb_proj, ((0, _VPAD - input_size), (0, 0)))
    w_slab = jnp.concatenate(
        [emb_proj, params["w_hh0"].T, params["w_ih1"].T, params["w_hh1"].T],
        axis=0).astype(jnp.float32)                            # (8 + 3H, H) = (32, 8)
    wfc_t = params["w_fc"].T.astype(jnp.float32)               # (H, C)
    b_slab = jnp.concatenate(
        [params["b_ih1"] + params["b_hh1"], params["b_fc"]]
    )[None, :].astype(jnp.float32)                             # (1, H + C)
    return {"w_slab": w_slab, "wfc_t": wfc_t, "b_slab": b_slab}


@jax.jit
def model_forward(x_ids, packed):
    """x_ids: (B, T) int32 token ids in [0, input_size).
    Returns (B*T, num_class), matching the PyTorch module's x.view(-1, C)."""
    B, T = x_ids.shape
    C = num_class
    ids_tm = x_ids.astype(jnp.int32).T.reshape(T * B, 1)       # time-major ids

    vmem = lambda: pl.BlockSpec(memory_space=pltpu.MemorySpace.VMEM)
    out_tm = pl.pallas_call(
        functools.partial(_rnn_kernel, B=B, T=T),
        out_shape=jax.ShapeDtypeStruct((T * B, C), jnp.float32),
        in_specs=[vmem() for _ in range(4)],
        out_specs=vmem(),
    )(ids_tm, packed["w_slab"], packed["wfc_t"], packed["b_slab"])

    # Time-major (t*B + b) rows -> PyTorch view(-1, C) order (b*T + t).
    # A trivial (16, 4) reorder done by XLA here instead of an in-kernel gather.
    return out_tm.reshape(T, B, C).transpose(1, 0, 2).reshape(B * T, C)


def reference_forward(x_ids, params):
    """Pure-JAX reference mirroring the PyTorch module."""
    B, T = x_ids.shape
    x = params["emb"][x_ids]                          # (B, T, E)
    h1 = jnp.zeros((B, hidden_size), jnp.float32)
    h2 = jnp.zeros((B, hidden_size), jnp.float32)
    outs = []
    for t in range(T):
        h1 = jnp.tanh(x[:, t] @ params["w_ih0"].T + params["b_ih0"]
                      + h1 @ params["w_hh0"].T + params["b_hh0"])
        h2 = jnp.tanh(h1 @ params["w_ih1"].T + params["b_ih1"]
                      + h2 @ params["w_hh1"].T + params["b_hh1"])
        outs.append(h2 @ params["w_fc"].T + params["b_fc"])
    y = jnp.stack(outs, axis=1)                       # (B, T, C)
    return y.reshape(B * T, num_class)


def init_params(key):
    ks = jax.random.split(key, 11)
    u = lambda k, shape, bound: jax.random.uniform(
        k, shape, jnp.float32, -bound, bound)
    s_rnn = 1.0 / (hidden_size ** 0.5)
    s_fc = 1.0 / (hidden_size ** 0.5)
    return {
        "emb":   jax.random.normal(ks[0], (input_size, embedding_size), jnp.float32),
        "w_ih0": u(ks[1], (hidden_size, embedding_size), s_rnn),
        "w_hh0": u(ks[2], (hidden_size, hidden_size), s_rnn),
        "b_ih0": u(ks[3], (hidden_size,), s_rnn),
        "b_hh0": u(ks[4], (hidden_size,), s_rnn),
        "w_ih1": u(ks[5], (hidden_size, hidden_size), s_rnn),
        "w_hh1": u(ks[6], (hidden_size, hidden_size), s_rnn),
        "b_ih1": u(ks[7], (hidden_size,), s_rnn),
        "b_hh1": u(ks[8], (hidden_size,), s_rnn),
        "w_fc":  u(ks[9], (num_class, hidden_size), s_fc),
        "b_fc":  u(ks[10], (num_class,), s_fc),
    }


if __name__ == "__main__":
    key = jax.random.PRNGKey(0)
    k_x, k_p = jax.random.split(key)
    B, T = 2, 8
    x_ids = jax.random.randint(k_x, (B, T), 0, input_size, dtype=jnp.int32)
    params = init_params(k_p)
    packed = pack_params(params)          # one-time packing, off the call path

    out = jax.block_until_ready(model_forward(x_ids, packed))
    ref = reference_forward(x_ids, params)

    assert out.shape == (B * T, num_class), out.shape
    assert jnp.allclose(out, ref, atol=1e-5, rtol=1e-5), \
        f"max err {jnp.max(jnp.abs(out - ref))}"
    print("KERNEL_OK")
</pallas_src>

<mosaic_0001>
module attributes {stable_mosaic.version = 11 : i64} {
  func.func @_rnn_kernel(%arg0: memref<16x1xi32, #tpu.memory_space<vmem>>, %arg1: memref<32x8xf32, #tpu.memory_space<vmem>>, %arg2: memref<8x4xf32, #tpu.memory_space<vmem>>, %arg3: memref<1x12xf32, #tpu.memory_space<vmem>>, %arg4: memref<16x4xf32, #tpu.memory_space<vmem>>) attributes {dimension_semantics = [], scalar_prefetch = 0 : i64, scratch_operands = 0 : i64, tpu.core_type = #tpu.core_type<tc>} {
    %c0 = arith.constant 0 : index
    %c0_0 = arith.constant 0 : index
    %0 = vector.load %arg1[%c0, %c0_0] : memref<32x8xf32, #tpu.memory_space<vmem>>, vector<8x8xf32>
    %c16 = arith.constant 16 : index
    %c0_1 = arith.constant 0 : index
    %1 = vector.load %arg1[%c16, %c0_1] : memref<32x8xf32, #tpu.memory_space<vmem>>, vector<8x8xf32>
    %c0_2 = arith.constant 0 : index
    %c0_3 = arith.constant 0 : index
    %2 = vector.load %arg3[%c0_2, %c0_3] : memref<1x12xf32, #tpu.memory_space<vmem>>, vector<1x8xf32>
    %c0_4 = arith.constant 0 : index
    %c8 = arith.constant 8 : index
    %3 = vector.load %arg3[%c0_4, %c8] : memref<1x12xf32, #tpu.memory_space<vmem>>, vector<1x4xf32>
    %c0_5 = arith.constant 0 : index
    %c0_6 = arith.constant 0 : index
    %4 = vector.load %arg0[%c0_5, %c0_6] : memref<16x1xi32, #tpu.memory_space<vmem>>, vector<16x1xi32>
    %5 = tpu.iota {dimensions = array<i32: 1>} : vector<16x8xi32>
    %6 = vector.broadcast %4 : vector<16x1xi32> to vector<16x8xi32>
    %7 = arith.cmpi eq, %6, %5 : vector<16x8xi32>
    %cst = arith.constant 1.000000e+00 : f32
    %cst_7 = arith.constant 0.000000e+00 : f32
    %8 = vector.broadcast %cst : f32 to vector<16x8xf32>
    %9 = vector.broadcast %cst_7 : f32 to vector<16x8xf32>
    %10 = arith.select %7, %8, %9 : vector<16x8xi1>, vector<16x8xf32>
    %cst_8 = arith.constant dense<0.000000e+00> : vector<16x8xf32>
    %11 = tpu.matmul %10, %0, %cst_8 {dimension_numbers = #tpu.dot_dimension_numbers<[1], [0], [0], [1], [0, 0, 1, 1], [], []>} : vector<16x8xf32>, vector<8x8xf32>, vector<16x8xf32> -> vector<16x8xf32>
    %12 = tpu.iota {dimensions = array<i32: 1>} : vector<1x8xi32>
    %c0_i32 = arith.constant 0 : i32
    %13 = vector.broadcast %c0_i32 : i32 to vector<1x8xi32>
    %14 = arith.cmpi eq, %12, %13 : vector<1x8xi32>
    %cst_9 = arith.constant 1.000000e+00 : f32
    %cst_10 = arith.constant 0.000000e+00 : f32
    %15 = vector.broadcast %cst_9 : f32 to vector<1x8xf32>
    %16 = vector.broadcast %cst_10 : f32 to vector<1x8xf32>
    %17 = arith.select %14, %15, %16 : vector<1x8xi1>, vector<1x8xf32>
    %c1_i32 = arith.constant 1 : i32
    %18 = vector.broadcast %c1_i32 : i32 to vector<1x8xi32>
    %19 = arith.cmpi eq, %12, %18 : vector<1x8xi32>
    %cst_11 = arith.constant 1.000000e+00 : f32
    %cst_12 = arith.constant 0.000000e+00 : f32
    %20 = vector.broadcast %cst_11 : f32 to vector<1x8xf32>
    %21 = vector.broadcast %cst_12 : f32 to vector<1x8xf32>
    %22 = arith.select %19, %20, %21 : vector<1x8xi1>, vector<1x8xf32>
    %c2_i32 = arith.constant 2 : i32
    %23 = vector.broadcast %c2_i32 : i32 to vector<1x8xi32>
    %24 = arith.cmpi eq, %12, %23 : vector<1x8xi32>
    %cst_13 = arith.constant 1.000000e+00 : f32
    %cst_14 = arith.constant 0.000000e+00 : f32
    %25 = vector.broadcast %cst_13 : f32 to vector<1x8xf32>
    %26 = vector.broadcast %cst_14 : f32 to vector<1x8xf32>
    %27 = arith.select %24, %25, %26 : vector<1x8xi1>, vector<1x8xf32>
    %c3_i32 = arith.constant 3 : i32
    %28 = vector.broadcast %c3_i32 : i32 to vector<1x8xi32>
    %29 = arith.cmpi eq, %12, %28 : vector<1x8xi32>
    %cst_15 = arith.constant 1.000000e+00 : f32
    %cst_16 = arith.constant 0.000000e+00 : f32
    %30 = vector.broadcast %cst_15 : f32 to vector<1x8xf32>
    %31 = vector.broadcast %cst_16 : f32 to vector<1x8xf32>
    %32 = arith.select %29, %30, %31 : vector<1x8xi1>, vector<1x8xf32>
    %c4_i32 = arith.constant 4 : i32
    %33 = vector.broadcast %c4_i32 : i32 to vector<1x8xi32>
    %34 = arith.cmpi eq, %12, %33 : vector<1x8xi32>
    %cst_17 = arith.constant 1.000000e+00 : f32
    %cst_18 = arith.constant 0.000000e+00 : f32
    %35 = vector.broadcast %cst_17 : f32 to vector<1x8xf32>
    %36 = vector.broadcast %cst_18 : f32 to vector<1x8xf32>
    %37 = arith.select %34, %35, %36 : vector<1x8xi1>, vector<1x8xf32>
    %c5_i32 = arith.constant 5 : i32
    %38 = vector.broadcast %c5_i32 : i32 to vector<1x8xi32>
    %39 = arith.cmpi eq, %12, %38 : vector<1x8xi32>
    %cst_19 = arith.constant 1.000000e+00 : f32
    %cst_20 = arith.constant 0.000000e+00 : f32
    %40 = vector.broadcast %cst_19 : f32 to vector<1x8xf32>
    %41 = vector.broadcast %cst_20 : f32 to vector<1x8xf32>
    %42 = arith.select %39, %40, %41 : vector<1x8xi1>, vector<1x8xf32>
    %c6_i32 = arith.constant 6 : i32
    %43 = vector.broadcast %c6_i32 : i32 to vector<1x8xi32>
    %44 = arith.cmpi eq, %12, %43 : vector<1x8xi32>
    %cst_21 = arith.constant 1.000000e+00 : f32
    %cst_22 = arith.constant 0.000000e+00 : f32
    %45 = vector.broadcast %cst_21 : f32 to vector<1x8xf32>
    %46 = vector.broadcast %cst_22 : f32 to vector<1x8xf32>
    %47 = arith.select %44, %45, %46 : vector<1x8xi1>, vector<1x8xf32>
    %c7_i32 = arith.constant 7 : i32
    %48 = vector.broadcast %c7_i32 : i32 to vector<1x8xi32>
    %49 = arith.cmpi eq, %12, %48 : vector<1x8xi32>
    %cst_23 = arith.constant 1.000000e+00 : f32
    %cst_24 = arith.constant 0.000000e+00 : f32
    %50 = vector.broadcast %cst_23 : f32 to vector<1x8xf32>
    %51 = vector.broadcast %cst_24 : f32 to vector<1x8xf32>
    %52 = arith.select %49, %50, %51 : vector<1x8xi1>, vector<1x8xf32>
    %c8_25 = arith.constant 8 : index
    %c0_26 = arith.constant 0 : index
    %53 = vector.load %arg1[%c8_25, %c0_26] : memref<32x8xf32, #tpu.memory_space<vmem>>, vector<1x8xf32>
    %54 = vector.shape_cast %53 : vector<1x8xf32> to vector<1x8xf32>
    %55 = vector.broadcast %54 : vector<1x8xf32> to vector<2x8xf32>
    %c9 = arith.constant 9 : index
    %c0_27 = arith.constant 0 : index
    %56 = vector.load %arg1[%c9, %c0_27] : memref<32x8xf32, #tpu.memory_space<vmem>>, vector<1x8xf32>
    %57 = vector.shape_cast %56 : vector<1x8xf32> to vector<1x8xf32>
    %58 = vector.broadcast %57 : vector<1x8xf32> to vector<2x8xf32>
    %c10 = arith.constant 10 : index
    %c0_28 = arith.constant 0 : index
    %59 = vector.load %arg1[%c10, %c0_28] : memref<32x8xf32, #tpu.memory_space<vmem>>, vector<1x8xf32>
    %60 = vector.shape_cast %59 : vector<1x8xf32> to vector<1x8xf32>
    %61 = vector.broadcast %60 : vector<1x8xf32> to vector<2x8xf32>
    %c11 = arith.constant 11 : index
    %c0_29 = arith.constant 0 : index
    %62 = vector.load %arg1[%c11, %c0_29] : memref<32x8xf32, #tpu.memory_space<vmem>>, vector<1x8xf32>
    %63 = vector.shape_cast %62 : vector<1x8xf32> to vector<1x8xf32>
    %64 = vector.broadcast %63 : vector<1x8xf32> to vector<2x8xf32>
    %c12 = arith.constant 12 : index
    %c0_30 = arith.constant 0 : index
    %65 = vector.load %arg1[%c12, %c0_30] : memref<32x8xf32, #tpu.memory_space<vmem>>, vector<1x8xf32>
    %66 = vector.shape_cast %65 : vector<1x8xf32> to vector<1x8xf32>
    %67 = vector.broadcast %66 : vector<1x8xf32> to vector<2x8xf32>
    %c13 = arith.constant 13 : index
    %c0_31 = arith.constant 0 : index
    %68 = vector.load %arg1[%c13, %c0_31] : memref<32x8xf32, #tpu.memory_space<vmem>>, vector<1x8xf32>
    %69 = vector.shape_cast %68 : vector<1x8xf32> to vector<1x8xf32>
    %70 = vector.broadcast %69 : vector<1x8xf32> to vector<2x8xf32>
    %c14 = arith.constant 14 : index
    %c0_32 = arith.constant 0 : index
    %71 = vector.load %arg1[%c14, %c0_32] : memref<32x8xf32, #tpu.memory_space<vmem>>, vector<1x8xf32>
    %72 = vector.shape_cast %71 : vector<1x8xf32> to vector<1x8xf32>
    %73 = vector.broadcast %72 : vector<1x8xf32> to vector<2x8xf32>
    %c15 = arith.constant 15 : index
    %c0_33 = arith.constant 0 : index
    %74 = vector.load %arg1[%c15, %c0_33] : memref<32x8xf32, #tpu.memory_space<vmem>>, vector<1x8xf32>
    %75 = vector.shape_cast %74 : vector<1x8xf32> to vector<1x8xf32>
    %76 = vector.broadcast %75 : vector<1x8xf32> to vector<2x8xf32>
    %c24 = arith.constant 24 : index
    %c0_34 = arith.constant 0 : index
    %77 = vector.load %arg1[%c24, %c0_34] : memref<32x8xf32, #tpu.memory_space<vmem>>, vector<1x8xf32>
    %78 = vector.shape_cast %77 : vector<1x8xf32> to vector<1x8xf32>
    %79 = vector.broadcast %78 : vector<1x8xf32> to vector<2x8xf32>
    %c25 = arith.constant 25 : index
    %c0_35 = arith.constant 0 : index
    %80 = vector.load %arg1[%c25, %c0_35] : memref<32x8xf32, #tpu.memory_space<vmem>>, vector<1x8xf32>
    %81 = vector.shape_cast %80 : vector<1x8xf32> to vector<1x8xf32>
    %82 = vector.broadcast %81 : vector<1x8xf32> to vector<2x8xf32>
    %c26 = arith.constant 26 : index
    %c0_36 = arith.constant 0 : index
    %83 = vector.load %arg1[%c26, %c0_36] : memref<32x8xf32, #tpu.memory_space<vmem>>, vector<1x8xf32>
    %84 = vector.shape_cast %83 : vector<1x8xf32> to vector<1x8xf32>
    %85 = vector.broadcast %84 : vector<1x8xf32> to vector<2x8xf32>
    %c27 = arith.constant 27 : index
    %c0_37 = arith.constant 0 : index
    %86 = vector.load %arg1[%c27, %c0_37] : memref<32x8xf32, #tpu.memory_space<vmem>>, vector<1x8xf32>
    %87 = vector.shape_cast %86 : vector<1x8xf32> to vector<1x8xf32>
    %88 = vector.broadcast %87 : vector<1x8xf32> to vector<2x8xf32>
    %c28 = arith.constant 28 : index
    %c0_38 = arith.constant 0 : index
    %89 = vector.load %arg1[%c28, %c0_38] : memref<32x8xf32, #tpu.memory_space<vmem>>, vector<1x8xf32>
    %90 = vector.shape_cast %89 : vector<1x8xf32> to vector<1x8xf32>
    %91 = vector.broadcast %90 : vector<1x8xf32> to vector<2x8xf32>
    %c29 = arith.constant 29 : index
    %c0_39 = arith.constant 0 : index
    %92 = vector.load %arg1[%c29, %c0_39] : memref<32x8xf32, #tpu.memory_space<vmem>>, vector<1x8xf32>
    %93 = vector.shape_cast %92 : vector<1x8xf32> to vector<1x8xf32>
    %94 = vector.broadcast %93 : vector<1x8xf32> to vector<2x8xf32>
    %c30 = arith.constant 30 : index
    %c0_40 = arith.constant 0 : index
    %95 = vector.load %arg1[%c30, %c0_40] : memref<32x8xf32, #tpu.memory_space<vmem>>, vector<1x8xf32>
    %96 = vector.shape_cast %95 : vector<1x8xf32> to vector<1x8xf32>
    %97 = vector.broadcast %96 : vector<1x8xf32> to vector<2x8xf32>
    %c31 = arith.constant 31 : index
    %c0_41 = arith.constant 0 : index
    %98 = vector.load %arg1[%c31, %c0_41] : memref<32x8xf32, #tpu.memory_space<vmem>>, vector<1x8xf32>
    %99 = vector.shape_cast %98 : vector<1x8xf32> to vector<1x8xf32>
    %100 = vector.broadcast %99 : vector<1x8xf32> to vector<2x8xf32>
    %cst_42 = arith.constant 0.000000e+00 : f32
    %101 = vector.broadcast %cst_42 : f32 to vector<2x8xf32>
    %102 = vector.extract_strided_slice %11 {offsets = [0, 0], sizes = [2, 8], strides = [1, 1]} : vector<16x8xf32> to vector<2x8xf32>
    %103 = vector.broadcast %17 : vector<1x8xf32> to vector<2x8xf32>
    %104 = arith.mulf %101, %103 : vector<2x8xf32>
    %cst_43 = arith.constant dense<0.000000e+00> : vector<2xf32>
    %105 = vector.multi_reduction <add>, %104, %cst_43 [1] : vector<2x8xf32> to vector<2xf32>
    %106 = vector.shape_cast %105 : vector<2xf32> to vector<2x1xf32>
    %107 = vector.broadcast %106 : vector<2x1xf32> to vector<2x8xf32>
    %108 = arith.mulf %107, %55 : vector<2x8xf32>
    %109 = vector.broadcast %22 : vector<1x8xf32> to vector<2x8xf32>
    %110 = arith.mulf %101, %109 : vector<2x8xf32>
    %cst_44 = arith.constant dense<0.000000e+00> : vector<2xf32>
    %111 = vector.multi_reduction <add>, %110, %cst_44 [1] : vector<2x8xf32> to vector<2xf32>
    %112 = vector.shape_cast %111 : vector<2xf32> to vector<2x1xf32>
    %113 = vector.broadcast %112 : vector<2x1xf32> to vector<2x8xf32>
    %114 = arith.mulf %113, %58 : vector<2x8xf32>
    %115 = vector.broadcast %27 : vector<1x8xf32> to vector<2x8xf32>
    %116 = arith.mulf %101, %115 : vector<2x8xf32>
    %cst_45 = arith.constant dense<0.000000e+00> : vector<2xf32>
    %117 = vector.multi_reduction <add>, %116, %cst_45 [1] : vector<2x8xf32> to vector<2xf32>
    %118 = vector.shape_cast %117 : vector<2xf32> to vector<2x1xf32>
    %119 = vector.broadcast %118 : vector<2x1xf32> to vector<2x8xf32>
    %120 = arith.mulf %119, %61 : vector<2x8xf32>
    %121 = vector.broadcast %32 : vector<1x8xf32> to vector<2x8xf32>
    %122 = arith.mulf %101, %121 : vector<2x8xf32>
    %cst_46 = arith.constant dense<0.000000e+00> : vector<2xf32>
    %123 = vector.multi_reduction <add>, %122, %cst_46 [1] : vector<2x8xf32> to vector<2xf32>
    %124 = vector.shape_cast %123 : vector<2xf32> to vector<2x1xf32>
    %125 = vector.broadcast %124 : vector<2x1xf32> to vector<2x8xf32>
    %126 = arith.mulf %125, %64 : vector<2x8xf32>
    %127 = vector.broadcast %37 : vector<1x8xf32> to vector<2x8xf32>
    %128 = arith.mulf %101, %127 : vector<2x8xf32>
    %cst_47 = arith.constant dense<0.000000e+00> : vector<2xf32>
    %129 = vector.multi_reduction <add>, %128, %cst_47 [1] : vector<2x8xf32> to vector<2xf32>
    %130 = vector.shape_cast %129 : vector<2xf32> to vector<2x1xf32>
    %131 = vector.broadcast %130 : vector<2x1xf32> to vector<2x8xf32>
    %132 = arith.mulf %131, %67 : vector<2x8xf32>
    %133 = vector.broadcast %42 : vector<1x8xf32> to vector<2x8xf32>
    %134 = arith.mulf %101, %133 : vector<2x8xf32>
    %cst_48 = arith.constant dense<0.000000e+00> : vector<2xf32>
    %135 = vector.multi_reduction <add>, %134, %cst_48 [1] : vector<2x8xf32> to vector<2xf32>
    %136 = vector.shape_cast %135 : vector<2xf32> to vector<2x1xf32>
    %137 = vector.broadcast %136 : vector<2x1xf32> to vector<2x8xf32>
    %138 = arith.mulf %137, %70 : vector<2x8xf32>
    %139 = vector.broadcast %47 : vector<1x8xf32> to vector<2x8xf32>
    %140 = arith.mulf %101, %139 : vector<2x8xf32>
    %cst_49 = arith.constant dense<0.000000e+00> : vector<2xf32>
    %141 = vector.multi_reduction <add>, %140, %cst_49 [1] : vector<2x8xf32> to vector<2xf32>
    %142 = vector.shape_cast %141 : vector<2xf32> to vector<2x1xf32>
    %143 = vector.broadcast %142 : vector<2x1xf32> to vector<2x8xf32>
    %144 = arith.mulf %143, %73 : vector<2x8xf32>
    %145 = vector.broadcast %52 : vector<1x8xf32> to vector<2x8xf32>
    %146 = arith.mulf %101, %145 : vector<2x8xf32>
    %cst_50 = arith.constant dense<0.000000e+00> : vector<2xf32>
    %147 = vector.multi_reduction <add>, %146, %cst_50 [1] : vector<2x8xf32> to vector<2xf32>
    %148 = vector.shape_cast %147 : vector<2xf32> to vector<2x1xf32>
    %149 = vector.broadcast %148 : vector<2x1xf32> to vector<2x8xf32>
    %150 = arith.mulf %149, %76 : vector<2x8xf32>
    %151 = arith.addf %108, %114 : vector<2x8xf32>
    %152 = arith.addf %120, %126 : vector<2x8xf32>
    %153 = arith.addf %132, %138 : vector<2x8xf32>
    %154 = arith.addf %144, %150 : vector<2x8xf32>
    %155 = arith.addf %151, %152 : vector<2x8xf32>
    %156 = arith.addf %153, %154 : vector<2x8xf32>
    %157 = arith.addf %155, %156 : vector<2x8xf32>
    %158 = arith.addf %102, %157 : vector<2x8xf32>
    %159 = math.tanh %158 : vector<2x8xf32>
    %160 = vector.extract_strided_slice %11 {offsets = [2, 0], sizes = [2, 8], strides = [1, 1]} : vector<16x8xf32> to vector<2x8xf32>
    %161 = vector.broadcast %17 : vector<1x8xf32> to vector<2x8xf32>
    %162 = arith.mulf %159, %161 : vector<2x8xf32>
    %cst_51 = arith.constant dense<0.000000e+00> : vector<2xf32>
    %163 = vector.multi_reduction <add>, %162, %cst_51 [1] : vector<2x8xf32> to vector<2xf32>
    %164 = vector.shape_cast %163 : vector<2xf32> to vector<2x1xf32>
    %165 = vector.broadcast %164 : vector<2x1xf32> to vector<2x8xf32>
    %166 = arith.mulf %165, %55 : vector<2x8xf32>
    %167 = vector.broadcast %22 : vector<1x8xf32> to vector<2x8xf32>
    %168 = arith.mulf %159, %167 : vector<2x8xf32>
    %cst_52 = arith.constant dense<0.000000e+00> : vector<2xf32>
    %169 = vector.multi_reduction <add>, %168, %cst_52 [1] : vector<2x8xf32> to vector<2xf32>
    %170 = vector.shape_cast %169 : vector<2xf32> to vector<2x1xf32>
    %171 = vector.broadcast %170 : vector<2x1xf32> to vector<2x8xf32>
    %172 = arith.mulf %171, %58 : vector<2x8xf32>
    %173 = vector.broadcast %27 : vector<1x8xf32> to vector<2x8xf32>
    %174 = arith.mulf %159, %173 : vector<2x8xf32>
    %cst_53 = arith.constant dense<0.000000e+00> : vector<2xf32>
    %175 = vector.multi_reduction <add>, %174, %cst_53 [1] : vector<2x8xf32> to vector<2xf32>
    %176 = vector.shape_cast %175 : vector<2xf32> to vector<2x1xf32>
    %177 = vector.broadcast %176 : vector<2x1xf32> to vector<2x8xf32>
    %178 = arith.mulf %177, %61 : vector<2x8xf32>
    %179 = vector.broadcast %32 : vector<1x8xf32> to vector<2x8xf32>
    %180 = arith.mulf %159, %179 : vector<2x8xf32>
    %cst_54 = arith.constant dense<0.000000e+00> : vector<2xf32>
    %181 = vector.multi_reduction <add>, %180, %cst_54 [1] : vector<2x8xf32> to vector<2xf32>
    %182 = vector.shape_cast %181 : vector<2xf32> to vector<2x1xf32>
    %183 = vector.broadcast %182 : vector<2x1xf32> to vector<2x8xf32>
    %184 = arith.mulf %183, %64 : vector<2x8xf32>
    %185 = vector.broadcast %37 : vector<1x8xf32> to vector<2x8xf32>
    %186 = arith.mulf %159, %185 : vector<2x8xf32>
    %cst_55 = arith.constant dense<0.000000e+00> : vector<2xf32>
    %187 = vector.multi_reduction <add>, %186, %cst_55 [1] : vector<2x8xf32> to vector<2xf32>
    %188 = vector.shape_cast %187 : vector<2xf32> to vector<2x1xf32>
    %189 = vector.broadcast %188 : vector<2x1xf32> to vector<2x8xf32>
    %190 = arith.mulf %189, %67 : vector<2x8xf32>
    %191 = vector.broadcast %42 : vector<1x8xf32> to vector<2x8xf32>
    %192 = arith.mulf %159, %191 : vector<2x8xf32>
    %cst_56 = arith.constant dense<0.000000e+00> : vector<2xf32>
    %193 = vector.multi_reduction <add>, %192, %cst_56 [1] : vector<2x8xf32> to vector<2xf32>
    %194 = vector.shape_cast %193 : vector<2xf32> to vector<2x1xf32>
    %195 = vector.broadcast %194 : vector<2x1xf32> to vector<2x8xf32>
    %196 = arith.mulf %195, %70 : vector<2x8xf32>
    %197 = vector.broadcast %47 : vector<1x8xf32> to vector<2x8xf32>
    %198 = arith.mulf %159, %197 : vector<2x8xf32>
    %cst_57 = arith.constant dense<0.000000e+00> : vector<2xf32>
    %199 = vector.multi_reduction <add>, %198, %cst_57 [1] : vector<2x8xf32> to vector<2xf32>
    %200 = vector.shape_cast %199 : vector<2xf32> to vector<2x1xf32>
    %201 = vector.broadcast %200 : vector<2x1xf32> to vector<2x8xf32>
    %202 = arith.mulf %201, %73 : vector<2x8xf32>
    %203 = vector.broadcast %52 : vector<1x8xf32> to vector<2x8xf32>
    %204 = arith.mulf %159, %203 : vector<2x8xf32>
    %cst_58 = arith.constant dense<0.000000e+00> : vector<2xf32>
    %205 = vector.multi_reduction <add>, %204, %cst_58 [1] : vector<2x8xf32> to vector<2xf32>
    %206 = vector.shape_cast %205 : vector<2xf32> to vector<2x1xf32>
    %207 = vector.broadcast %206 : vector<2x1xf32> to vector<2x8xf32>
    %208 = arith.mulf %207, %76 : vector<2x8xf32>
    %209 = arith.addf %166, %172 : vector<2x8xf32>
    %210 = arith.addf %178, %184 : vector<2x8xf32>
    %211 = arith.addf %190, %196 : vector<2x8xf32>
    %212 = arith.addf %202, %208 : vector<2x8xf32>
    %213 = arith.addf %209, %210 : vector<2x8xf32>
    %214 = arith.addf %211, %212 : vector<2x8xf32>
    %215 = arith.addf %213, %214 : vector<2x8xf32>
    %216 = arith.addf %160, %215 : vector<2x8xf32>
    %217 = math.tanh %216 : vector<2x8xf32>
    %218 = vector.extract_strided_slice %11 {offsets = [4, 0], sizes = [2, 8], strides = [1, 1]} : vector<16x8xf32> to vector<2x8xf32>
    %219 = vector.broadcast %17 : vector<1x8xf32> to vector<2x8xf32>
    %220 = arith.mulf %217, %219 : vector<2x8xf32>
    %cst_59 = arith.constant dense<0.000000e+00> : vector<2xf32>
    %221 = vector.multi_reduction <add>, %220, %cst_59 [1] : vector<2x8xf32> to vector<2xf32>
    %222 = vector.shape_cast %221 : vector<2xf32> to vector<2x1xf32>
    %223 = vector.broadcast %222 : vector<2x1xf32> to vector<2x8xf32>
    %224 = arith.mulf %223, %55 : vector<2x8xf32>
    %225 = vector.broadcast %22 : vector<1x8xf32> to vector<2x8xf32>
    %226 = arith.mulf %217, %225 : vector<2x8xf32>
    %cst_60 = arith.constant dense<0.000000e+00> : vector<2xf32>
    %227 = vector.multi_reduction <add>, %226, %cst_60 [1] : vector<2x8xf32> to vector<2xf32>
    %228 = vector.shape_cast %227 : vector<2xf32> to vector<2x1xf32>
    %229 = vector.broadcast %228 : vector<2x1xf32> to vector<2x8xf32>
    %230 = arith.mulf %229, %58 : vector<2x8xf32>
    %231 = vector.broadcast %27 : vector<1x8xf32> to vector<2x8xf32>
    %232 = arith.mulf %217, %231 : vector<2x8xf32>
    %cst_61 = arith.constant dense<0.000000e+00> : vector<2xf32>
    %233 = vector.multi_reduction <add>, %232, %cst_61 [1] : vector<2x8xf32> to vector<2xf32>
    %234 = vector.shape_cast %233 : vector<2xf32> to vector<2x1xf32>
    %235 = vector.broadcast %234 : vector<2x1xf32> to vector<2x8xf32>
    %236 = arith.mulf %235, %61 : vector<2x8xf32>
    %237 = vector.broadcast %32 : vector<1x8xf32> to vector<2x8xf32>
    %238 = arith.mulf %217, %237 : vector<2x8xf32>
    %cst_62 = arith.constant dense<0.000000e+00> : vector<2xf32>
    %239 = vector.multi_reduction <add>, %238, %cst_62 [1] : vector<2x8xf32> to vector<2xf32>
    %240 = vector.shape_cast %239 : vector<2xf32> to vector<2x1xf32>
    %241 = vector.broadcast %240 : vector<2x1xf32> to vector<2x8xf32>
    %242 = arith.mulf %241, %64 : vector<2x8xf32>
    %243 = vector.broadcast %37 : vector<1x8xf32> to vector<2x8xf32>
    %244 = arith.mulf %217, %243 : vector<2x8xf32>
    %cst_63 = arith.constant dense<0.000000e+00> : vector<2xf32>
    %245 = vector.multi_reduction <add>, %244, %cst_63 [1] : vector<2x8xf32> to vector<2xf32>
    %246 = vector.shape_cast %245 : vector<2xf32> to vector<2x1xf32>
    %247 = vector.broadcast %246 : vector<2x1xf32> to vector<2x8xf32>
    %248 = arith.mulf %247, %67 : vector<2x8xf32>
    %249 = vector.broadcast %42 : vector<1x8xf32> to vector<2x8xf32>
    %250 = arith.mulf %217, %249 : vector<2x8xf32>
    %cst_64 = arith.constant dense<0.000000e+00> : vector<2xf32>
    %251 = vector.multi_reduction <add>, %250, %cst_64 [1] : vector<2x8xf32> to vector<2xf32>
    %252 = vector.shape_cast %251 : vector<2xf32> to vector<2x1xf32>
    %253 = vector.broadcast %252 : vector<2x1xf32> to vector<2x8xf32>
    %254 = arith.mulf %253, %70 : vector<2x8xf32>
    %255 = vector.broadcast %47 : vector<1x8xf32> to vector<2x8xf32>
    %256 = arith.mulf %217, %255 : vector<2x8xf32>
    %cst_65 = arith.constant dense<0.000000e+00> : vector<2xf32>
    %257 = vector.multi_reduction <add>, %256, %cst_65 [1] : vector<2x8xf32> to vector<2xf32>
    %258 = vector.shape_cast %257 : vector<2xf32> to vector<2x1xf32>
    %259 = vector.broadcast %258 : vector<2x1xf32> to vector<2x8xf32>
    %260 = arith.mulf %259, %73 : vector<2x8xf32>
    %261 = vector.broadcast %52 : vector<1x8xf32> to vector<2x8xf32>
    %262 = arith.mulf %217, %261 : vector<2x8xf32>
    %cst_66 = arith.constant dense<0.000000e+00> : vector<2xf32>
    %263 = vector.multi_reduction <add>, %262, %cst_66 [1] : vector<2x8xf32> to vector<2xf32>
    %264 = vector.shape_cast %263 : vector<2xf32> to vector<2x1xf32>
    %265 = vector.broadcast %264 : vector<2x1xf32> to vector<2x8xf32>
    %266 = arith.mulf %265, %76 : vector<2x8xf32>
    %267 = arith.addf %224, %230 : vector<2x8xf32>
    %268 = arith.addf %236, %242 : vector<2x8xf32>
    %269 = arith.addf %248, %254 : vector<2x8xf32>
    %270 = arith.addf %260, %266 : vector<2x8xf32>
    %271 = arith.addf %267, %268 : vector<2x8xf32>
    %272 = arith.addf %269, %270 : vector<2x8xf32>
    %273 = arith.addf %271, %272 : vector<2x8xf32>
    %274 = arith.addf %218, %273 : vector<2x8xf32>
    %275 = math.tanh %274 : vector<2x8xf32>
    %276 = vector.extract_strided_slice %11 {offsets = [6, 0], sizes = [2, 8], strides = [1, 1]} : vector<16x8xf32> to vector<2x8xf32>
    %277 = vector.broadcast %17 : vector<1x8xf32> to vector<2x8xf32>
    %278 = arith.mulf %275, %277 : vector<2x8xf32>
    %cst_67 = arith.constant dense<0.000000e+00> : vector<2xf32>
    %279 = vector.multi_reduction <add>, %278, %cst_67 [1] : vector<2x8xf32> to vector<2xf32>
    %280 = vector.shape_cast %279 : vector<2xf32> to vector<2x1xf32>
    %281 = vector.broadcast %280 : vector<2x1xf32> to vector<2x8xf32>
    %282 = arith.mulf %281, %55 : vector<2x8xf32>
    %283 = vector.broadcast %22 : vector<1x8xf32> to vector<2x8xf32>
    %284 = arith.mulf %275, %283 : vector<2x8xf32>
    %cst_68 = arith.constant dense<0.000000e+00> : vector<2xf32>
    %285 = vector.multi_reduction <add>, %284, %cst_68 [1] : vector<2x8xf32> to vector<2xf32>
    %286 = vector.shape_cast %285 : vector<2xf32> to vector<2x1xf32>
    %287 = vector.broadcast %286 : vector<2x1xf32> to vector<2x8xf32>
    %288 = arith.mulf %287, %58 : vector<2x8xf32>
    %289 = vector.broadcast %27 : vector<1x8xf32> to vector<2x8xf32>
    %290 = arith.mulf %275, %289 : vector<2x8xf32>
    %cst_69 = arith.constant dense<0.000000e+00> : vector<2xf32>
    %291 = vector.multi_reduction <add>, %290, %cst_69 [1] : vector<2x8xf32> to vector<2xf32>
    %292 = vector.shape_cast %291 : vector<2xf32> to vector<2x1xf32>
    %293 = vector.broadcast %292 : vector<2x1xf32> to vector<2x8xf32>
    %294 = arith.mulf %293, %61 : vector<2x8xf32>
    %295 = vector.broadcast %32 : vector<1x8xf32> to vector<2x8xf32>
    %296 = arith.mulf %275, %295 : vector<2x8xf32>
    %cst_70 = arith.constant dense<0.000000e+00> : vector<2xf32>
    %297 = vector.multi_reduction <add>, %296, %cst_70 [1] : vector<2x8xf32> to vector<2xf32>
    %298 = vector.shape_cast %297 : vector<2xf32> to vector<2x1xf32>
    %299 = vector.broadcast %298 : vector<2x1xf32> to vector<2x8xf32>
    %300 = arith.mulf %299, %64 : vector<2x8xf32>
    %301 = vector.broadcast %37 : vector<1x8xf32> to vector<2x8xf32>
    %302 = arith.mulf %275, %301 : vector<2x8xf32>
    %cst_71 = arith.constant dense<0.000000e+00> : vector<2xf32>
    %303 = vector.multi_reduction <add>, %302, %cst_71 [1] : vector<2x8xf32> to vector<2xf32>
    %304 = vector.shape_cast %303 : vector<2xf32> to vector<2x1xf32>
    %305 = vector.broadcast %304 : vector<2x1xf32> to vector<2x8xf32>
    %306 = arith.mulf %305, %67 : vector<2x8xf32>
    %307 = vector.broadcast %42 : vector<1x8xf32> to vector<2x8xf32>
    %308 = arith.mulf %275, %307 : vector<2x8xf32>
    %cst_72 = arith.constant dense<0.000000e+00> : vector<2xf32>
    %309 = vector.multi_reduction <add>, %308, %cst_72 [1] : vector<2x8xf32> to vector<2xf32>
    %310 = vector.shape_cast %309 : vector<2xf32> to vector<2x1xf32>
    %311 = vector.broadcast %310 : vector<2x1xf32> to vector<2x8xf32>
    %312 = arith.mulf %311, %70 : vector<2x8xf32>
    %313 = vector.broadcast %47 : vector<1x8xf32> to vector<2x8xf32>
    %314 = arith.mulf %275, %313 : vector<2x8xf32>
    %cst_73 = arith.constant dense<0.000000e+00> : vector<2xf32>
    %315 = vector.multi_reduction <add>, %314, %cst_73 [1] : vector<2x8xf32> to vector<2xf32>
    %316 = vector.shape_cast %315 : vector<2xf32> to vector<2x1xf32>
    %317 = vector.broadcast %316 : vector<2x1xf32> to vector<2x8xf32>
    %318 = arith.mulf %317, %73 : vector<2x8xf32>
    %319 = vector.broadcast %52 : vector<1x8xf32> to vector<2x8xf32>
    %320 = arith.mulf %275, %319 : vector<2x8xf32>
    %cst_74 = arith.constant dense<0.000000e+00> : vector<2xf32>
    %321 = vector.multi_reduction <add>, %320, %cst_74 [1] : vector<2x8xf32> to vector<2xf32>
    %322 = vector.shape_cast %321 : vector<2xf32> to vector<2x1xf32>
    %323 = vector.broadcast %322 : vector<2x1xf32> to vector<2x8xf32>
    %324 = arith.mulf %323, %76 : vector<2x8xf32>
    %325 = arith.addf %282, %288 : vector<2x8xf32>
    %326 = arith.addf %294, %300 : vector<2x8xf32>
    %327 = arith.addf %306, %312 : vector<2x8xf32>
    %328 = arith.addf %318, %324 : vector<2x8xf32>
    %329 = arith.addf %325, %326 : vector<2x8xf32>
    %330 = arith.addf %327, %328 : vector<2x8xf32>
    %331 = arith.addf %329, %330 : vector<2x8xf32>
    %332 = arith.addf %276, %331 : vector<2x8xf32>
    %333 = math.tanh %332 : vector<2x8xf32>
    %334 = vector.extract_strided_slice %11 {offsets = [8, 0], sizes = [2, 8], strides = [1, 1]} : vector<16x8xf32> to vector<2x8xf32>
    %335 = vector.broadcast %17 : vector<1x8xf32> to vector<2x8xf32>
    %336 = arith.mulf %333, %335 : vector<2x8xf32>
    %cst_75 = arith.constant dense<0.000000e+00> : vector<2xf32>
    %337 = vector.multi_reduction <add>, %336, %cst_75 [1] : vector<2x8xf32> to vector<2xf32>
    %338 = vector.shape_cast %337 : vector<2xf32> to vector<2x1xf32>
    %339 = vector.broadcast %338 : vector<2x1xf32> to vector<2x8xf32>
    %340 = arith.mulf %339, %55 : vector<2x8xf32>
    %341 = vector.broadcast %22 : vector<1x8xf32> to vector<2x8xf32>
    %342 = arith.mulf %333, %341 : vector<2x8xf32>
    %cst_76 = arith.constant dense<0.000000e+00> : vector<2xf32>
    %343 = vector.multi_reduction <add>, %342, %cst_76 [1] : vector<2x8xf32> to vector<2xf32>
    %344 = vector.shape_cast %343 : vector<2xf32> to vector<2x1xf32>
    %345 = vector.broadcast %344 : vector<2x1xf32> to vector<2x8xf32>
    %346 = arith.mulf %345, %58 : vector<2x8xf32>
    %347 = vector.broadcast %27 : vector<1x8xf32> to vector<2x8xf32>
    %348 = arith.mulf %333, %347 : vector<2x8xf32>
    %cst_77 = arith.constant dense<0.000000e+00> : vector<2xf32>
    %349 = vector.multi_reduction <add>, %348, %cst_77 [1] : vector<2x8xf32> to vector<2xf32>
    %350 = vector.shape_cast %349 : vector<2xf32> to vector<2x1xf32>
    %351 = vector.broadcast %350 : vector<2x1xf32> to vector<2x8xf32>
    %352 = arith.mulf %351, %61 : vector<2x8xf32>
    %353 = vector.broadcast %32 : vector<1x8xf32> to vector<2x8xf32>
    %354 = arith.mulf %333, %353 : vector<2x8xf32>
    %cst_78 = arith.constant dense<0.000000e+00> : vector<2xf32>
    %355 = vector.multi_reduction <add>, %354, %cst_78 [1] : vector<2x8xf32> to vector<2xf32>
    %356 = vector.shape_cast %355 : vector<2xf32> to vector<2x1xf32>
    %357 = vector.broadcast %356 : vector<2x1xf32> to vector<2x8xf32>
    %358 = arith.mulf %357, %64 : vector<2x8xf32>
    %359 = vector.broadcast %37 : vector<1x8xf32> to vector<2x8xf32>
    %360 = arith.mulf %333, %359 : vector<2x8xf32>
    %cst_79 = arith.constant dense<0.000000e+00> : vector<2xf32>
    %361 = vector.multi_reduction <add>, %360, %cst_79 [1] : vector<2x8xf32> to vector<2xf32>
    %362 = vector.shape_cast %361 : vector<2xf32> to vector<2x1xf32>
    %363 = vector.broadcast %362 : vector<2x1xf32> to vector<2x8xf32>
    %364 = arith.mulf %363, %67 : vector<2x8xf32>
    %365 = vector.broadcast %42 : vector<1x8xf32> to vector<2x8xf32>
    %366 = arith.mulf %333, %365 : vector<2x8xf32>
    %cst_80 = arith.constant dense<0.000000e+00> : vector<2xf32>
    %367 = vector.multi_reduction <add>, %366, %cst_80 [1] : vector<2x8xf32> to vector<2xf32>
    %368 = vector.shape_cast %367 : vector<2xf32> to vector<2x1xf32>
    %369 = vector.broadcast %368 : vector<2x1xf32> to vector<2x8xf32>
    %370 = arith.mulf %369, %70 : vector<2x8xf32>
    %371 = vector.broadcast %47 : vector<1x8xf32> to vector<2x8xf32>
    %372 = arith.mulf %333, %371 : vector<2x8xf32>
    %cst_81 = arith.constant dense<0.000000e+00> : vector<2xf32>
    %373 = vector.multi_reduction <add>, %372, %cst_81 [1] : vector<2x8xf32> to vector<2xf32>
    %374 = vector.shape_cast %373 : vector<2xf32> to vector<2x1xf32>
    %375 = vector.broadcast %374 : vector<2x1xf32> to vector<2x8xf32>
    %376 = arith.mulf %375, %73 : vector<2x8xf32>
    %377 = vector.broadcast %52 : vector<1x8xf32> to vector<2x8xf32>
    %378 = arith.mulf %333, %377 : vector<2x8xf32>
    %cst_82 = arith.constant dense<0.000000e+00> : vector<2xf32>
    %379 = vector.multi_reduction <add>, %378, %cst_82 [1] : vector<2x8xf32> to vector<2xf32>
    %380 = vector.shape_cast %379 : vector<2xf32> to vector<2x1xf32>
    %381 = vector.broadcast %380 : vector<2x1xf32> to vector<2x8xf32>
    %382 = arith.mulf %381, %76 : vector<2x8xf32>
    %383 = arith.addf %340, %346 : vector<2x8xf32>
    %384 = arith.addf %352, %358 : vector<2x8xf32>
    %385 = arith.addf %364, %370 : vector<2x8xf32>
    %386 = arith.addf %376, %382 : vector<2x8xf32>
    %387 = arith.addf %383, %384 : vector<2x8xf32>
    %388 = arith.addf %385, %386 : vector<2x8xf32>
    %389 = arith.addf %387, %388 : vector<2x8xf32>
    %390 = arith.addf %334, %389 : vector<2x8xf32>
    %391 = math.tanh %390 : vector<2x8xf32>
    %392 = vector.extract_strided_slice %11 {offsets = [10, 0], sizes = [2, 8], strides = [1, 1]} : vector<16x8xf32> to vector<2x8xf32>
    %393 = vector.broadcast %17 : vector<1x8xf32> to vector<2x8xf32>
    %394 = arith.mulf %391, %393 : vector<2x8xf32>
    %cst_83 = arith.constant dense<0.000000e+00> : vector<2xf32>
    %395 = vector.multi_reduction <add>, %394, %cst_83 [1] : vector<2x8xf32> to vector<2xf32>
    %396 = vector.shape_cast %395 : vector<2xf32> to vector<2x1xf32>
    %397 = vector.broadcast %396 : vector<2x1xf32> to vector<2x8xf32>
    %398 = arith.mulf %397, %55 : vector<2x8xf32>
    %399 = vector.broadcast %22 : vector<1x8xf32> to vector<2x8xf32>
    %400 = arith.mulf %391, %399 : vector<2x8xf32>
    %cst_84 = arith.constant dense<0.000000e+00> : vector<2xf32>
    %401 = vector.multi_reduction <add>, %400, %cst_84 [1] : vector<2x8xf32> to vector<2xf32>
    %402 = vector.shape_cast %401 : vector<2xf32> to vector<2x1xf32>
    %403 = vector.broadcast %402 : vector<2x1xf32> to vector<2x8xf32>
    %404 = arith.mulf %403, %58 : vector<2x8xf32>
    %405 = vector.broadcast %27 : vector<1x8xf32> to vector<2x8xf32>
    %406 = arith.mulf %391, %405 : vector<2x8xf32>
    %cst_85 = arith.constant dense<0.000000e+00> : vector<2xf32>
    %407 = vector.multi_reduction <add>, %406, %cst_85 [1] : vector<2x8xf32> to vector<2xf32>
    %408 = vector.shape_cast %407 : vector<2xf32> to vector<2x1xf32>
    %409 = vector.broadcast %408 : vector<2x1xf32> to vector<2x8xf32>
    %410 = arith.mulf %409, %61 : vector<2x8xf32>
    %411 = vector.broadcast %32 : vector<1x8xf32> to vector<2x8xf32>
    %412 = arith.mulf %391, %411 : vector<2x8xf32>
    %cst_86 = arith.constant dense<0.000000e+00> : vector<2xf32>
    %413 = vector.multi_reduction <add>, %412, %cst_86 [1] : vector<2x8xf32> to vector<2xf32>
    %414 = vector.shape_cast %413 : vector<2xf32> to vector<2x1xf32>
    %415 = vector.broadcast %414 : vector<2x1xf32> to vector<2x8xf32>
    %416 = arith.mulf %415, %64 : vector<2x8xf32>
    %417 = vector.broadcast %37 : vector<1x8xf32> to vector<2x8xf32>
    %418 = arith.mulf %391, %417 : vector<2x8xf32>
    %cst_87 = arith.constant dense<0.000000e+00> : vector<2xf32>
    %419 = vector.multi_reduction <add>, %418, %cst_87 [1] : vector<2x8xf32> to vector<2xf32>
    %420 = vector.shape_cast %419 : vector<2xf32> to vector<2x1xf32>
    %421 = vector.broadcast %420 : vector<2x1xf32> to vector<2x8xf32>
    %422 = arith.mulf %421, %67 : vector<2x8xf32>
    %423 = vector.broadcast %42 : vector<1x8xf32> to vector<2x8xf32>
    %424 = arith.mulf %391, %423 : vector<2x8xf32>
    %cst_88 = arith.constant dense<0.000000e+00> : vector<2xf32>
    %425 = vector.multi_reduction <add>, %424, %cst_88 [1] : vector<2x8xf32> to vector<2xf32>
    %426 = vector.shape_cast %425 : vector<2xf32> to vector<2x1xf32>
    %427 = vector.broadcast %426 : vector<2x1xf32> to vector<2x8xf32>
    %428 = arith.mulf %427, %70 : vector<2x8xf32>
    %429 = vector.broadcast %47 : vector<1x8xf32> to vector<2x8xf32>
    %430 = arith.mulf %391, %429 : vector<2x8xf32>
    %cst_89 = arith.constant dense<0.000000e+00> : vector<2xf32>
    %431 = vector.multi_reduction <add>, %430, %cst_89 [1] : vector<2x8xf32> to vector<2xf32>
    %432 = vector.shape_cast %431 : vector<2xf32> to vector<2x1xf32>
    %433 = vector.broadcast %432 : vector<2x1xf32> to vector<2x8xf32>
    %434 = arith.mulf %433, %73 : vector<2x8xf32>
    %435 = vector.broadcast %52 : vector<1x8xf32> to vector<2x8xf32>
    %436 = arith.mulf %391, %435 : vector<2x8xf32>
    %cst_90 = arith.constant dense<0.000000e+00> : vector<2xf32>
    %437 = vector.multi_reduction <add>, %436, %cst_90 [1] : vector<2x8xf32> to vector<2xf32>
    %438 = vector.shape_cast %437 : vector<2xf32> to vector<2x1xf32>
    %439 = vector.broadcast %438 : vector<2x1xf32> to vector<2x8xf32>
    %440 = arith.mulf %439, %76 : vector<2x8xf32>
    %441 = arith.addf %398, %404 : vector<2x8xf32>
    %442 = arith.addf %410, %416 : vector<2x8xf32>
    %443 = arith.addf %422, %428 : vector<2x8xf32>
    %444 = arith.addf %434, %440 : vector<2x8xf32>
    %445 = arith.addf %441, %442 : vector<2x8xf32>
    %446 = arith.addf %443, %444 : vector<2x8xf32>
    %447 = arith.addf %445, %446 : vector<2x8xf32>
    %448 = arith.addf %392, %447 : vector<2x8xf32>
    %449 = math.tanh %448 : vector<2x8xf32>
    %450 = vector.extract_strided_slice %11 {offsets = [12, 0], sizes = [2, 8], strides = [1, 1]} : vector<16x8xf32> to vector<2x8xf32>
    %451 = vector.broadcast %17 : vector<1x8xf32> to vector<2x8xf32>
    %452 = arith.mulf %449, %451 : vector<2x8xf32>
    %cst_91 = arith.constant dense<0.000000e+00> : vector<2xf32>
    %453 = vector.multi_reduction <add>, %452, %cst_91 [1] : vector<2x8xf32> to vector<2xf32>
    %454 = vector.shape_cast %453 : vector<2xf32> to vector<2x1xf32>
    %455 = vector.broadcast %454 : vector<2x1xf32> to vector<2x8xf32>
    %456 = arith.mulf %455, %55 : vector<2x8xf32>
    %457 = vector.broadcast %22 : vector<1x8xf32> to vector<2x8xf32>
    %458 = arith.mulf %449, %457 : vector<2x8xf32>
    %cst_92 = arith.constant dense<0.000000e+00> : vector<2xf32>
    %459 = vector.multi_reduction <add>, %458, %cst_92 [1] : vector<2x8xf32> to vector<2xf32>
    %460 = vector.shape_cast %459 : vector<2xf32> to vector<2x1xf32>
    %461 = vector.broadcast %460 : vector<2x1xf32> to vector<2x8xf32>
    %462 = arith.mulf %461, %58 : vector<2x8xf32>
    %463 = vector.broadcast %27 : vector<1x8xf32> to vector<2x8xf32>
    %464 = arith.mulf %449, %463 : vector<2x8xf32>
    %cst_93 = arith.constant dense<0.000000e+00> : vector<2xf32>
    %465 = vector.multi_reduction <add>, %464, %cst_93 [1] : vector<2x8xf32> to vector<2xf32>
    %466 = vector.shape_cast %465 : vector<2xf32> to vector<2x1xf32>
    %467 = vector.broadcast %466 : vector<2x1xf32> to vector<2x8xf32>
    %468 = arith.mulf %467, %61 : vector<2x8xf32>
    %469 = vector.broadcast %32 : vector<1x8xf32> to vector<2x8xf32>
    %470 = arith.mulf %449, %469 : vector<2x8xf32>
    %cst_94 = arith.constant dense<0.000000e+00> : vector<2xf32>
    %471 = vector.multi_reduction <add>, %470, %cst_94 [1] : vector<2x8xf32> to vector<2xf32>
    %472 = vector.shape_cast %471 : vector<2xf32> to vector<2x1xf32>
    %473 = vector.broadcast %472 : vector<2x1xf32> to vector<2x8xf32>
    %474 = arith.mulf %473, %64 : vector<2x8xf32>
    %475 = vector.broadcast %37 : vector<1x8xf32> to vector<2x8xf32>
    %476 = arith.mulf %449, %475 : vector<2x8xf32>
    %cst_95 = arith.constant dense<0.000000e+00> : vector<2xf32>
    %477 = vector.multi_reduction <add>, %476, %cst_95 [1] : vector<2x8xf32> to vector<2xf32>
    %478 = vector.shape_cast %477 : vector<2xf32> to vector<2x1xf32>
    %479 = vector.broadcast %478 : vector<2x1xf32> to vector<2x8xf32>
    %480 = arith.mulf %479, %67 : vector<2x8xf32>
    %481 = vector.broadcast %42 : vector<1x8xf32> to vector<2x8xf32>
    %482 = arith.mulf %449, %481 : vector<2x8xf32>
    %cst_96 = arith.constant dense<0.000000e+00> : vector<2xf32>
    %483 = vector.multi_reduction <add>, %482, %cst_96 [1] : vector<2x8xf32> to vector<2xf32>
    %484 = vector.shape_cast %483 : vector<2xf32> to vector<2x1xf32>
    %485 = vector.broadcast %484 : vector<2x1xf32> to vector<2x8xf32>
    %486 = arith.mulf %485, %70 : vector<2x8xf32>
    %487 = vector.broadcast %47 : vector<1x8xf32> to vector<2x8xf32>
    %488 = arith.mulf %449, %487 : vector<2x8xf32>
    %cst_97 = arith.constant dense<0.000000e+00> : vector<2xf32>
    %489 = vector.multi_reduction <add>, %488, %cst_97 [1] : vector<2x8xf32> to vector<2xf32>
    %490 = vector.shape_cast %489 : vector<2xf32> to vector<2x1xf32>
    %491 = vector.broadcast %490 : vector<2x1xf32> to vector<2x8xf32>
    %492 = arith.mulf %491, %73 : vector<2x8xf32>
    %493 = vector.broadcast %52 : vector<1x8xf32> to vector<2x8xf32>
    %494 = arith.mulf %449, %493 : vector<2x8xf32>
    %cst_98 = arith.constant dense<0.000000e+00> : vector<2xf32>
    %495 = vector.multi_reduction <add>, %494, %cst_98 [1] : vector<2x8xf32> to vector<2xf32>
    %496 = vector.shape_cast %495 : vector<2xf32> to vector<2x1xf32>
    %497 = vector.broadcast %496 : vector<2x1xf32> to vector<2x8xf32>
    %498 = arith.mulf %497, %76 : vector<2x8xf32>
    %499 = arith.addf %456, %462 : vector<2x8xf32>
    %500 = arith.addf %468, %474 : vector<2x8xf32>
    %501 = arith.addf %480, %486 : vector<2x8xf32>
    %502 = arith.addf %492, %498 : vector<2x8xf32>
    %503 = arith.addf %499, %500 : vector<2x8xf32>
    %504 = arith.addf %501, %502 : vector<2x8xf32>
    %505 = arith.addf %503, %504 : vector<2x8xf32>
    %506 = arith.addf %450, %505 : vector<2x8xf32>
    %507 = math.tanh %506 : vector<2x8xf32>
    %508 = vector.extract_strided_slice %11 {offsets = [14, 0], sizes = [2, 8], strides = [1, 1]} : vector<16x8xf32> to vector<2x8xf32>
    %509 = vector.broadcast %17 : vector<1x8xf32> to vector<2x8xf32>
    %510 = arith.mulf %507, %509 : vector<2x8xf32>
    %cst_99 = arith.constant dense<0.000000e+00> : vector<2xf32>
    %511 = vector.multi_reduction <add>, %510, %cst_99 [1] : vector<2x8xf32> to vector<2xf32>
    %512 = vector.shape_cast %511 : vector<2xf32> to vector<2x1xf32>
    %513 = vector.broadcast %512 : vector<2x1xf32> to vector<2x8xf32>
    %514 = arith.mulf %513, %55 : vector<2x8xf32>
    %515 = vector.broadcast %22 : vector<1x8xf32> to vector<2x8xf32>
    %516 = arith.mulf %507, %515 : vector<2x8xf32>
    %cst_100 = arith.constant dense<0.000000e+00> : vector<2xf32>
    %517 = vector.multi_reduction <add>, %516, %cst_100 [1] : vector<2x8xf32> to vector<2xf32>
    %518 = vector.shape_cast %517 : vector<2xf32> to vector<2x1xf32>
    %519 = vector.broadcast %518 : vector<2x1xf32> to vector<2x8xf32>
    %520 = arith.mulf %519, %58 : vector<2x8xf32>
    %521 = vector.broadcast %27 : vector<1x8xf32> to vector<2x8xf32>
    %522 = arith.mulf %507, %521 : vector<2x8xf32>
    %cst_101 = arith.constant dense<0.000000e+00> : vector<2xf32>
    %523 = vector.multi_reduction <add>, %522, %cst_101 [1] : vector<2x8xf32> to vector<2xf32>
    %524 = vector.shape_cast %523 : vector<2xf32> to vector<2x1xf32>
    %525 = vector.broadcast %524 : vector<2x1xf32> to vector<2x8xf32>
    %526 = arith.mulf %525, %61 : vector<2x8xf32>
    %527 = vector.broadcast %32 : vector<1x8xf32> to vector<2x8xf32>
    %528 = arith.mulf %507, %527 : vector<2x8xf32>
    %cst_102 = arith.constant dense<0.000000e+00> : vector<2xf32>
    %529 = vector.multi_reduction <add>, %528, %cst_102 [1] : vector<2x8xf32> to vector<2xf32>
    %530 = vector.shape_cast %529 : vector<2xf32> to vector<2x1xf32>
    %531 = vector.broadcast %530 : vector<2x1xf32> to vector<2x8xf32>
    %532 = arith.mulf %531, %64 : vector<2x8xf32>
    %533 = vector.broadcast %37 : vector<1x8xf32> to vector<2x8xf32>
    %534 = arith.mulf %507, %533 : vector<2x8xf32>
    %cst_103 = arith.constant dense<0.000000e+00> : vector<2xf32>
    %535 = vector.multi_reduction <add>, %534, %cst_103 [1] : vector<2x8xf32> to vector<2xf32>
    %536 = vector.shape_cast %535 : vector<2xf32> to vector<2x1xf32>
    %537 = vector.broadcast %536 : vector<2x1xf32> to vector<2x8xf32>
    %538 = arith.mulf %537, %67 : vector<2x8xf32>
    %539 = vector.broadcast %42 : vector<1x8xf32> to vector<2x8xf32>
    %540 = arith.mulf %507, %539 : vector<2x8xf32>
    %cst_104 = arith.constant dense<0.000000e+00> : vector<2xf32>
    %541 = vector.multi_reduction <add>, %540, %cst_104 [1] : vector<2x8xf32> to vector<2xf32>
    %542 = vector.shape_cast %541 : vector<2xf32> to vector<2x1xf32>
    %543 = vector.broadcast %542 : vector<2x1xf32> to vector<2x8xf32>
    %544 = arith.mulf %543, %70 : vector<2x8xf32>
    %545 = vector.broadcast %47 : vector<1x8xf32> to vector<2x8xf32>
    %546 = arith.mulf %507, %545 : vector<2x8xf32>
    %cst_105 = arith.constant dense<0.000000e+00> : vector<2xf32>
    %547 = vector.multi_reduction <add>, %546, %cst_105 [1] : vector<2x8xf32> to vector<2xf32>
    %548 = vector.shape_cast %547 : vector<2xf32> to vector<2x1xf32>
    %549 = vector.broadcast %548 : vector<2x1xf32> to vector<2x8xf32>
    %550 = arith.mulf %549, %73 : vector<2x8xf32>
    %551 = vector.broadcast %52 : vector<1x8xf32> to vector<2x8xf32>
    %552 = arith.mulf %507, %551 : vector<2x8xf32>
    %cst_106 = arith.constant dense<0.000000e+00> : vector<2xf32>
    %553 = vector.multi_reduction <add>, %552, %cst_106 [1] : vector<2x8xf32> to vector<2xf32>
    %554 = vector.shape_cast %553 : vector<2xf32> to vector<2x1xf32>
    %555 = vector.broadcast %554 : vector<2x1xf32> to vector<2x8xf32>
    %556 = arith.mulf %555, %76 : vector<2x8xf32>
    %557 = arith.addf %514, %520 : vector<2x8xf32>
    %558 = arith.addf %526, %532 : vector<2x8xf32>
    %559 = arith.addf %538, %544 : vector<2x8xf32>
    %560 = arith.addf %550, %556 : vector<2x8xf32>
    %561 = arith.addf %557, %558 : vector<2x8xf32>
    %562 = arith.addf %559, %560 : vector<2x8xf32>
    %563 = arith.addf %561, %562 : vector<2x8xf32>
    %564 = arith.addf %508, %563 : vector<2x8xf32>
    %565 = math.tanh %564 : vector<2x8xf32>
    %566 = tpu.concatenate %159, %217, %275, %333, %391, %449, %507, %565 in 0 : vector<2x8xf32>, vector<2x8xf32>, vector<2x8xf32>, vector<2x8xf32>, vector<2x8xf32>, vector<2x8xf32>, vector<2x8xf32>, vector<2x8xf32> -> vector<16x8xf32>
    %cst_107 = arith.constant dense<0.000000e+00> : vector<16x8xf32>
    %567 = tpu.matmul %566, %1, %cst_107 {dimension_numbers = #tpu.dot_dimension_numbers<[1], [0], [0], [1], [0, 0, 1, 1], [], []>} : vector<16x8xf32>, vector<8x8xf32>, vector<16x8xf32> -> vector<16x8xf32>
    %568 = vector.broadcast %2 : vector<1x8xf32> to vector<16x8xf32>
    %569 = arith.addf %567, %568 : vector<16x8xf32>
    %cst_108 = arith.constant 0.000000e+00 : f32
    %570 = vector.broadcast %cst_108 : f32 to vector<2x8xf32>
    %571 = vector.extract_strided_slice %569 {offsets = [0, 0], sizes = [2, 8], strides = [1, 1]} : vector<16x8xf32> to vector<2x8xf32>
    %572 = vector.broadcast %17 : vector<1x8xf32> to vector<2x8xf32>
    %573 = arith.mulf %570, %572 : vector<2x8xf32>
    %cst_109 = arith.constant dense<0.000000e+00> : vector<2xf32>
    %574 = vector.multi_reduction <add>, %573, %cst_109 [1] : vector<2x8xf32> to vector<2xf32>
    %575 = vector.shape_cast %574 : vector<2xf32> to vector<2x1xf32>
    %576 = vector.broadcast %575 : vector<2x1xf32> to vector<2x8xf32>
    %577 = arith.mulf %576, %79 : vector<2x8xf32>
    %578 = vector.broadcast %22 : vector<1x8xf32> to vector<2x8xf32>
    %579 = arith.mulf %570, %578 : vector<2x8xf32>
    %cst_110 = arith.constant dense<0.000000e+00> : vector<2xf32>
    %580 = vector.multi_reduction <add>, %579, %cst_110 [1] : vector<2x8xf32> to vector<2xf32>
    %581 = vector.shape_cast %580 : vector<2xf32> to vector<2x1xf32>
    %582 = vector.broadcast %581 : vector<2x1xf32> to vector<2x8xf32>
    %583 = arith.mulf %582, %82 : vector<2x8xf32>
    %584 = vector.broadcast %27 : vector<1x8xf32> to vector<2x8xf32>
    %585 = arith.mulf %570, %584 : vector<2x8xf32>
    %cst_111 = arith.constant dense<0.000000e+00> : vector<2xf32>
    %586 = vector.multi_reduction <add>, %585, %cst_111 [1] : vector<2x8xf32> to vector<2xf32>
    %587 = vector.shape_cast %586 : vector<2xf32> to vector<2x1xf32>
    %588 = vector.broadcast %587 : vector<2x1xf32> to vector<2x8xf32>
    %589 = arith.mulf %588, %85 : vector<2x8xf32>
    %590 = vector.broadcast %32 : vector<1x8xf32> to vector<2x8xf32>
    %591 = arith.mulf %570, %590 : vector<2x8xf32>
    %cst_112 = arith.constant dense<0.000000e+00> : vector<2xf32>
    %592 = vector.multi_reduction <add>, %591, %cst_112 [1] : vector<2x8xf32> to vector<2xf32>
    %593 = vector.shape_cast %592 : vector<2xf32> to vector<2x1xf32>
    %594 = vector.broadcast %593 : vector<2x1xf32> to vector<2x8xf32>
    %595 = arith.mulf %594, %88 : vector<2x8xf32>
    %596 = vector.broadcast %37 : vector<1x8xf32> to vector<2x8xf32>
    %597 = arith.mulf %570, %596 : vector<2x8xf32>
    %cst_113 = arith.constant dense<0.000000e+00> : vector<2xf32>
    %598 = vector.multi_reduction <add>, %597, %cst_113 [1] : vector<2x8xf32> to vector<2xf32>
    %599 = vector.shape_cast %598 : vector<2xf32> to vector<2x1xf32>
    %600 = vector.broadcast %599 : vector<2x1xf32> to vector<2x8xf32>
    %601 = arith.mulf %600, %91 : vector<2x8xf32>
    %602 = vector.broadcast %42 : vector<1x8xf32> to vector<2x8xf32>
    %603 = arith.mulf %570, %602 : vector<2x8xf32>
    %cst_114 = arith.constant dense<0.000000e+00> : vector<2xf32>
    %604 = vector.multi_reduction <add>, %603, %cst_114 [1] : vector<2x8xf32> to vector<2xf32>
    %605 = vector.shape_cast %604 : vector<2xf32> to vector<2x1xf32>
    %606 = vector.broadcast %605 : vector<2x1xf32> to vector<2x8xf32>
    %607 = arith.mulf %606, %94 : vector<2x8xf32>
    %608 = vector.broadcast %47 : vector<1x8xf32> to vector<2x8xf32>
    %609 = arith.mulf %570, %608 : vector<2x8xf32>
    %cst_115 = arith.constant dense<0.000000e+00> : vector<2xf32>
    %610 = vector.multi_reduction <add>, %609, %cst_115 [1] : vector<2x8xf32> to vector<2xf32>
    %611 = vector.shape_cast %610 : vector<2xf32> to vector<2x1xf32>
    %612 = vector.broadcast %611 : vector<2x1xf32> to vector<2x8xf32>
    %613 = arith.mulf %612, %97 : vector<2x8xf32>
    %614 = vector.broadcast %52 : vector<1x8xf32> to vector<2x8xf32>
    %615 = arith.mulf %570, %614 : vector<2x8xf32>
    %cst_116 = arith.constant dense<0.000000e+00> : vector<2xf32>
    %616 = vector.multi_reduction <add>, %615, %cst_116 [1] : vector<2x8xf32> to vector<2xf32>
    %617 = vector.shape_cast %616 : vector<2xf32> to vector<2x1xf32>
    %618 = vector.broadcast %617 : vector<2x1xf32> to vector<2x8xf32>
    %619 = arith.mulf %618, %100 : vector<2x8xf32>
    %620 = arith.addf %577, %583 : vector<2x8xf32>
    %621 = arith.addf %589, %595 : vector<2x8xf32>
    %622 = arith.addf %601, %607 : vector<2x8xf32>
    %623 = arith.addf %613, %619 : vector<2x8xf32>
    %624 = arith.addf %620, %621 : vector<2x8xf32>
    %625 = arith.addf %622, %623 : vector<2x8xf32>
    %626 = arith.addf %624, %625 : vector<2x8xf32>
    %627 = arith.addf %571, %626 : vector<2x8xf32>
    %628 = math.tanh %627 : vector<2x8xf32>
    %629 = vector.extract_strided_slice %569 {offsets = [2, 0], sizes = [2, 8], strides = [1, 1]} : vector<16x8xf32> to vector<2x8xf32>
    %630 = vector.broadcast %17 : vector<1x8xf32> to vector<2x8xf32>
    %631 = arith.mulf %628, %630 : vector<2x8xf32>
    %cst_117 = arith.constant dense<0.000000e+00> : vector<2xf32>
    %632 = vector.multi_reduction <add>, %631, %cst_117 [1] : vector<2x8xf32> to vector<2xf32>
    %633 = vector.shape_cast %632 : vector<2xf32> to vector<2x1xf32>
    %634 = vector.broadcast %633 : vector<2x1xf32> to vector<2x8xf32>
    %635 = arith.mulf %634, %79 : vector<2x8xf32>
    %636 = vector.broadcast %22 : vector<1x8xf32> to vector<2x8xf32>
    %637 = arith.mulf %628, %636 : vector<2x8xf32>
    %cst_118 = arith.constant dense<0.000000e+00> : vector<2xf32>
    %638 = vector.multi_reduction <add>, %637, %cst_118 [1] : vector<2x8xf32> to vector<2xf32>
    %639 = vector.shape_cast %638 : vector<2xf32> to vector<2x1xf32>
    %640 = vector.broadcast %639 : vector<2x1xf32> to vector<2x8xf32>
    %641 = arith.mulf %640, %82 : vector<2x8xf32>
    %642 = vector.broadcast %27 : vector<1x8xf32> to vector<2x8xf32>
    %643 = arith.mulf %628, %642 : vector<2x8xf32>
    %cst_119 = arith.constant dense<0.000000e+00> : vector<2xf32>
    %644 = vector.multi_reduction <add>, %643, %cst_119 [1] : vector<2x8xf32> to vector<2xf32>
    %645 = vector.shape_cast %644 : vector<2xf32> to vector<2x1xf32>
    %646 = vector.broadcast %645 : vector<2x1xf32> to vector<2x8xf32>
    %647 = arith.mulf %646, %85 : vector<2x8xf32>
    %648 = vector.broadcast %32 : vector<1x8xf32> to vector<2x8xf32>
    %649 = arith.mulf %628, %648 : vector<2x8xf32>
    %cst_120 = arith.constant dense<0.000000e+00> : vector<2xf32>
    %650 = vector.multi_reduction <add>, %649, %cst_120 [1] : vector<2x8xf32> to vector<2xf32>
    %651 = vector.shape_cast %650 : vector<2xf32> to vector<2x1xf32>
    %652 = vector.broadcast %651 : vector<2x1xf32> to vector<2x8xf32>
    %653 = arith.mulf %652, %88 : vector<2x8xf32>
    %654 = vector.broadcast %37 : vector<1x8xf32> to vector<2x8xf32>
    %655 = arith.mulf %628, %654 : vector<2x8xf32>
    %cst_121 = arith.constant dense<0.000000e+00> : vector<2xf32>
    %656 = vector.multi_reduction <add>, %655, %cst_121 [1] : vector<2x8xf32> to vector<2xf32>
    %657 = vector.shape_cast %656 : vector<2xf32> to vector<2x1xf32>
    %658 = vector.broadcast %657 : vector<2x1xf32> to vector<2x8xf32>
    %659 = arith.mulf %658, %91 : vector<2x8xf32>
    %660 = vector.broadcast %42 : vector<1x8xf32> to vector<2x8xf32>
    %661 = arith.mulf %628, %660 : vector<2x8xf32>
    %cst_122 = arith.constant dense<0.000000e+00> : vector<2xf32>
    %662 = vector.multi_reduction <add>, %661, %cst_122 [1] : vector<2x8xf32> to vector<2xf32>
    %663 = vector.shape_cast %662 : vector<2xf32> to vector<2x1xf32>
    %664 = vector.broadcast %663 : vector<2x1xf32> to vector<2x8xf32>
    %665 = arith.mulf %664, %94 : vector<2x8xf32>
    %666 = vector.broadcast %47 : vector<1x8xf32> to vector<2x8xf32>
    %667 = arith.mulf %628, %666 : vector<2x8xf32>
    %cst_123 = arith.constant dense<0.000000e+00> : vector<2xf32>
    %668 = vector.multi_reduction <add>, %667, %cst_123 [1] : vector<2x8xf32> to vector<2xf32>
    %669 = vector.shape_cast %668 : vector<2xf32> to vector<2x1xf32>
    %670 = vector.broadcast %669 : vector<2x1xf32> to vector<2x8xf32>
    %671 = arith.mulf %670, %97 : vector<2x8xf32>
    %672 = vector.broadcast %52 : vector<1x8xf32> to vector<2x8xf32>
    %673 = arith.mulf %628, %672 : vector<2x8xf32>
    %cst_124 = arith.constant dense<0.000000e+00> : vector<2xf32>
    %674 = vector.multi_reduction <add>, %673, %cst_124 [1] : vector<2x8xf32> to vector<2xf32>
    %675 = vector.shape_cast %674 : vector<2xf32> to vector<2x1xf32>
    %676 = vector.broadcast %675 : vector<2x1xf32> to vector<2x8xf32>
    %677 = arith.mulf %676, %100 : vector<2x8xf32>
    %678 = arith.addf %635, %641 : vector<2x8xf32>
    %679 = arith.addf %647, %653 : vector<2x8xf32>
    %680 = arith.addf %659, %665 : vector<2x8xf32>
    %681 = arith.addf %671, %677 : vector<2x8xf32>
    %682 = arith.addf %678, %679 : vector<2x8xf32>
    %683 = arith.addf %680, %681 : vector<2x8xf32>
    %684 = arith.addf %682, %683 : vector<2x8xf32>
    %685 = arith.addf %629, %684 : vector<2x8xf32>
    %686 = math.tanh %685 : vector<2x8xf32>
    %687 = vector.extract_strided_slice %569 {offsets = [4, 0], sizes = [2, 8], strides = [1, 1]} : vector<16x8xf32> to vector<2x8xf32>
    %688 = vector.broadcast %17 : vector<1x8xf32> to vector<2x8xf32>
    %689 = arith.mulf %686, %688 : vector<2x8xf32>
    %cst_125 = arith.constant dense<0.000000e+00> : vector<2xf32>
    %690 = vector.multi_reduction <add>, %689, %cst_125 [1] : vector<2x8xf32> to vector<2xf32>
    %691 = vector.shape_cast %690 : vector<2xf32> to vector<2x1xf32>
    %692 = vector.broadcast %691 : vector<2x1xf32> to vector<2x8xf32>
    %693 = arith.mulf %692, %79 : vector<2x8xf32>
    %694 = vector.broadcast %22 : vector<1x8xf32> to vector<2x8xf32>
    %695 = arith.mulf %686, %694 : vector<2x8xf32>
    %cst_126 = arith.constant dense<0.000000e+00> : vector<2xf32>
    %696 = vector.multi_reduction <add>, %695, %cst_126 [1] : vector<2x8xf32> to vector<2xf32>
    %697 = vector.shape_cast %696 : vector<2xf32> to vector<2x1xf32>
    %698 = vector.broadcast %697 : vector<2x1xf32> to vector<2x8xf32>
    %699 = arith.mulf %698, %82 : vector<2x8xf32>
    %700 = vector.broadcast %27 : vector<1x8xf32> to vector<2x8xf32>
    %701 = arith.mulf %686, %700 : vector<2x8xf32>
    %cst_127 = arith.constant dense<0.000000e+00> : vector<2xf32>
    %702 = vector.multi_reduction <add>, %701, %cst_127 [1] : vector<2x8xf32> to vector<2xf32>
    %703 = vector.shape_cast %702 : vector<2xf32> to vector<2x1xf32>
    %704 = vector.broadcast %703 : vector<2x1xf32> to vector<2x8xf32>
    %705 = arith.mulf %704, %85 : vector<2x8xf32>
    %706 = vector.broadcast %32 : vector<1x8xf32> to vector<2x8xf32>
    %707 = arith.mulf %686, %706 : vector<2x8xf32>
    %cst_128 = arith.constant dense<0.000000e+00> : vector<2xf32>
    %708 = vector.multi_reduction <add>, %707, %cst_128 [1] : vector<2x8xf32> to vector<2xf32>
    %709 = vector.shape_cast %708 : vector<2xf32> to vector<2x1xf32>
    %710 = vector.broadcast %709 : vector<2x1xf32> to vector<2x8xf32>
    %711 = arith.mulf %710, %88 : vector<2x8xf32>
    %712 = vector.broadcast %37 : vector<1x8xf32> to vector<2x8xf32>
    %713 = arith.mulf %686, %712 : vector<2x8xf32>
    %cst_129 = arith.constant dense<0.000000e+00> : vector<2xf32>
    %714 = vector.multi_reduction <add>, %713, %cst_129 [1] : vector<2x8xf32> to vector<2xf32>
    %715 = vector.shape_cast %714 : vector<2xf32> to vector<2x1xf32>
    %716 = vector.broadcast %715 : vector<2x1xf32> to vector<2x8xf32>
    %717 = arith.mulf %716, %91 : vector<2x8xf32>
    %718 = vector.broadcast %42 : vector<1x8xf32> to vector<2x8xf32>
    %719 = arith.mulf %686, %718 : vector<2x8xf32>
    %cst_130 = arith.constant dense<0.000000e+00> : vector<2xf32>
    %720 = vector.multi_reduction <add>, %719, %cst_130 [1] : vector<2x8xf32> to vector<2xf32>
    %721 = vector.shape_cast %720 : vector<2xf32> to vector<2x1xf32>
    %722 = vector.broadcast %721 : vector<2x1xf32> to vector<2x8xf32>
    %723 = arith.mulf %722, %94 : vector<2x8xf32>
    %724 = vector.broadcast %47 : vector<1x8xf32> to vector<2x8xf32>
    %725 = arith.mulf %686, %724 : vector<2x8xf32>
    %cst_131 = arith.constant dense<0.000000e+00> : vector<2xf32>
    %726 = vector.multi_reduction <add>, %725, %cst_131 [1] : vector<2x8xf32> to vector<2xf32>
    %727 = vector.shape_cast %726 : vector<2xf32> to vector<2x1xf32>
    %728 = vector.broadcast %727 : vector<2x1xf32> to vector<2x8xf32>
    %729 = arith.mulf %728, %97 : vector<2x8xf32>
    %730 = vector.broadcast %52 : vector<1x8xf32> to vector<2x8xf32>
    %731 = arith.mulf %686, %730 : vector<2x8xf32>
    %cst_132 = arith.constant dense<0.000000e+00> : vector<2xf32>
    %732 = vector.multi_reduction <add>, %731, %cst_132 [1] : vector<2x8xf32> to vector<2xf32>
    %733 = vector.shape_cast %732 : vector<2xf32> to vector<2x1xf32>
    %734 = vector.broadcast %733 : vector<2x1xf32> to vector<2x8xf32>
    %735 = arith.mulf %734, %100 : vector<2x8xf32>
    %736 = arith.addf %693, %699 : vector<2x8xf32>
    %737 = arith.addf %705, %711 : vector<2x8xf32>
    %738 = arith.addf %717, %723 : vector<2x8xf32>
    %739 = arith.addf %729, %735 : vector<2x8xf32>
    %740 = arith.addf %736, %737 : vector<2x8xf32>
    %741 = arith.addf %738, %739 : vector<2x8xf32>
    %742 = arith.addf %740, %741 : vector<2x8xf32>
    %743 = arith.addf %687, %742 : vector<2x8xf32>
    %744 = math.tanh %743 : vector<2x8xf32>
    %745 = vector.extract_strided_slice %569 {offsets = [6, 0], sizes = [2, 8], strides = [1, 1]} : vector<16x8xf32> to vector<2x8xf32>
    %746 = vector.broadcast %17 : vector<1x8xf32> to vector<2x8xf32>
    %747 = arith.mulf %744, %746 : vector<2x8xf32>
    %cst_133 = arith.constant dense<0.000000e+00> : vector<2xf32>
    %748 = vector.multi_reduction <add>, %747, %cst_133 [1] : vector<2x8xf32> to vector<2xf32>
    %749 = vector.shape_cast %748 : vector<2xf32> to vector<2x1xf32>
    %750 = vector.broadcast %749 : vector<2x1xf32> to vector<2x8xf32>
    %751 = arith.mulf %750, %79 : vector<2x8xf32>
    %752 = vector.broadcast %22 : vector<1x8xf32> to vector<2x8xf32>
    %753 = arith.mulf %744, %752 : vector<2x8xf32>
    %cst_134 = arith.constant dense<0.000000e+00> : vector<2xf32>
    %754 = vector.multi_reduction <add>, %753, %cst_134 [1] : vector<2x8xf32> to vector<2xf32>
    %755 = vector.shape_cast %754 : vector<2xf32> to vector<2x1xf32>
    %756 = vector.broadcast %755 : vector<2x1xf32> to vector<2x8xf32>
    %757 = arith.mulf %756, %82 : vector<2x8xf32>
    %758 = vector.broadcast %27 : vector<1x8xf32> to vector<2x8xf32>
    %759 = arith.mulf %744, %758 : vector<2x8xf32>
    %cst_135 = arith.constant dense<0.000000e+00> : vector<2xf32>
    %760 = vector.multi_reduction <add>, %759, %cst_135 [1] : vector<2x8xf32> to vector<2xf32>
    %761 = vector.shape_cast %760 : vector<2xf32> to vector<2x1xf32>
    %762 = vector.broadcast %761 : vector<2x1xf32> to vector<2x8xf32>
    %763 = arith.mulf %762, %85 : vector<2x8xf32>
    %764 = vector.broadcast %32 : vector<1x8xf32> to vector<2x8xf32>
    %765 = arith.mulf %744, %764 : vector<2x8xf32>
    %cst_136 = arith.constant dense<0.000000e+00> : vector<2xf32>
    %766 = vector.multi_reduction <add>, %765, %cst_136 [1] : vector<2x8xf32> to vector<2xf32>
    %767 = vector.shape_cast %766 : vector<2xf32> to vector<2x1xf32>
    %768 = vector.broadcast %767 : vector<2x1xf32> to vector<2x8xf32>
    %769 = arith.mulf %768, %88 : vector<2x8xf32>
    %770 = vector.broadcast %37 : vector<1x8xf32> to vector<2x8xf32>
    %771 = arith.mulf %744, %770 : vector<2x8xf32>
    %cst_137 = arith.constant dense<0.000000e+00> : vector<2xf32>
    %772 = vector.multi_reduction <add>, %771, %cst_137 [1] : vector<2x8xf32> to vector<2xf32>
    %773 = vector.shape_cast %772 : vector<2xf32> to vector<2x1xf32>
    %774 = vector.broadcast %773 : vector<2x1xf32> to vector<2x8xf32>
    %775 = arith.mulf %774, %91 : vector<2x8xf32>
    %776 = vector.broadcast %42 : vector<1x8xf32> to vector<2x8xf32>
    %777 = arith.mulf %744, %776 : vector<2x8xf32>
    %cst_138 = arith.constant dense<0.000000e+00> : vector<2xf32>
    %778 = vector.multi_reduction <add>, %777, %cst_138 [1] : vector<2x8xf32> to vector<2xf32>
    %779 = vector.shape_cast %778 : vector<2xf32> to vector<2x1xf32>
    %780 = vector.broadcast %779 : vector<2x1xf32> to vector<2x8xf32>
    %781 = arith.mulf %780, %94 : vector<2x8xf32>
    %782 = vector.broadcast %47 : vector<1x8xf32> to vector<2x8xf32>
    %783 = arith.mulf %744, %782 : vector<2x8xf32>
    %cst_139 = arith.constant dense<0.000000e+00> : vector<2xf32>
    %784 = vector.multi_reduction <add>, %783, %cst_139 [1] : vector<2x8xf32> to vector<2xf32>
    %785 = vector.shape_cast %784 : vector<2xf32> to vector<2x1xf32>
    %786 = vector.broadcast %785 : vector<2x1xf32> to vector<2x8xf32>
    %787 = arith.mulf %786, %97 : vector<2x8xf32>
    %788 = vector.broadcast %52 : vector<1x8xf32> to vector<2x8xf32>
    %789 = arith.mulf %744, %788 : vector<2x8xf32>
    %cst_140 = arith.constant dense<0.000000e+00> : vector<2xf32>
    %790 = vector.multi_reduction <add>, %789, %cst_140 [1] : vector<2x8xf32> to vector<2xf32>
    %791 = vector.shape_cast %790 : vector<2xf32> to vector<2x1xf32>
    %792 = vector.broadcast %791 : vector<2x1xf32> to vector<2x8xf32>
    %793 = arith.mulf %792, %100 : vector<2x8xf32>
    %794 = arith.addf %751, %757 : vector<2x8xf32>
    %795 = arith.addf %763, %769 : vector<2x8xf32>
    %796 = arith.addf %775, %781 : vector<2x8xf32>
    %797 = arith.addf %787, %793 : vector<2x8xf32>
    %798 = arith.addf %794, %795 : vector<2x8xf32>
    %799 = arith.addf %796, %797 : vector<2x8xf32>
    %800 = arith.addf %798, %799 : vector<2x8xf32>
    %801 = arith.addf %745, %800 : vector<2x8xf32>
    %802 = math.tanh %801 : vector<2x8xf32>
    %803 = vector.extract_strided_slice %569 {offsets = [8, 0], sizes = [2, 8], strides = [1, 1]} : vector<16x8xf32> to vector<2x8xf32>
    %804 = vector.broadcast %17 : vector<1x8xf32> to vector<2x8xf32>
    %805 = arith.mulf %802, %804 : vector<2x8xf32>
    %cst_141 = arith.constant dense<0.000000e+00> : vector<2xf32>
    %806 = vector.multi_reduction <add>, %805, %cst_141 [1] : vector<2x8xf32> to vector<2xf32>
    %807 = vector.shape_cast %806 : vector<2xf32> to vector<2x1xf32>
    %808 = vector.broadcast %807 : vector<2x1xf32> to vector<2x8xf32>
    %809 = arith.mulf %808, %79 : vector<2x8xf32>
    %810 = vector.broadcast %22 : vector<1x8xf32> to vector<2x8xf32>
    %811 = arith.mulf %802, %810 : vector<2x8xf32>
    %cst_142 = arith.constant dense<0.000000e+00> : vector<2xf32>
    %812 = vector.multi_reduction <add>, %811, %cst_142 [1] : vector<2x8xf32> to vector<2xf32>
    %813 = vector.shape_cast %812 : vector<2xf32> to vector<2x1xf32>
    %814 = vector.broadcast %813 : vector<2x1xf32> to vector<2x8xf32>
    %815 = arith.mulf %814, %82 : vector<2x8xf32>
    %816 = vector.broadcast %27 : vector<1x8xf32> to vector<2x8xf32>
    %817 = arith.mulf %802, %816 : vector<2x8xf32>
    %cst_143 = arith.constant dense<0.000000e+00> : vector<2xf32>
    %818 = vector.multi_reduction <add>, %817, %cst_143 [1] : vector<2x8xf32> to vector<2xf32>
    %819 = vector.shape_cast %818 : vector<2xf32> to vector<2x1xf32>
    %820 = vector.broadcast %819 : vector<2x1xf32> to vector<2x8xf32>
    %821 = arith.mulf %820, %85 : vector<2x8xf32>
    %822 = vector.broadcast %32 : vector<1x8xf32> to vector<2x8xf32>
    %823 = arith.mulf %802, %822 : vector<2x8xf32>
    %cst_144 = arith.constant dense<0.000000e+00> : vector<2xf32>
    %824 = vector.multi_reduction <add>, %823, %cst_144 [1] : vector<2x8xf32> to vector<2xf32>
    %825 = vector.shape_cast %824 : vector<2xf32> to vector<2x1xf32>
    %826 = vector.broadcast %825 : vector<2x1xf32> to vector<2x8xf32>
    %827 = arith.mulf %826, %88 : vector<2x8xf32>
    %828 = vector.broadcast %37 : vector<1x8xf32> to vector<2x8xf32>
    %829 = arith.mulf %802, %828 : vector<2x8xf32>
    %cst_145 = arith.constant dense<0.000000e+00> : vector<2xf32>
    %830 = vector.multi_reduction <add>, %829, %cst_145 [1] : vector<2x8xf32> to vector<2xf32>
    %831 = vector.shape_cast %830 : vector<2xf32> to vector<2x1xf32>
    %832 = vector.broadcast %831 : vector<2x1xf32> to vector<2x8xf32>
    %833 = arith.mulf %832, %91 : vector<2x8xf32>
    %834 = vector.broadcast %42 : vector<1x8xf32> to vector<2x8xf32>
    %835 = arith.mulf %802, %834 : vector<2x8xf32>
    %cst_146 = arith.constant dense<0.000000e+00> : vector<2xf32>
    %836 = vector.multi_reduction <add>, %835, %cst_146 [1] : vector<2x8xf32> to vector<2xf32>
    %837 = vector.shape_cast %836 : vector<2xf32> to vector<2x1xf32>
    %838 = vector.broadcast %837 : vector<2x1xf32> to vector<2x8xf32>
    %839 = arith.mulf %838, %94 : vector<2x8xf32>
    %840 = vector.broadcast %47 : vector<1x8xf32> to vector<2x8xf32>
    %841 = arith.mulf %802, %840 : vector<2x8xf32>
    %cst_147 = arith.constant dense<0.000000e+00> : vector<2xf32>
    %842 = vector.multi_reduction <add>, %841, %cst_147 [1] : vector<2x8xf32> to vector<2xf32>
    %843 = vector.shape_cast %842 : vector<2xf32> to vector<2x1xf32>
    %844 = vector.broadcast %843 : vector<2x1xf32> to vector<2x8xf32>
    %845 = arith.mulf %844, %97 : vector<2x8xf32>
    %846 = vector.broadcast %52 : vector<1x8xf32> to vector<2x8xf32>
    %847 = arith.mulf %802, %846 : vector<2x8xf32>
    %cst_148 = arith.constant dense<0.000000e+00> : vector<2xf32>
    %848 = vector.multi_reduction <add>, %847, %cst_148 [1] : vector<2x8xf32> to vector<2xf32>
    %849 = vector.shape_cast %848 : vector<2xf32> to vector<2x1xf32>
    %850 = vector.broadcast %849 : vector<2x1xf32> to vector<2x8xf32>
    %851 = arith.mulf %850, %100 : vector<2x8xf32>
    %852 = arith.addf %809, %815 : vector<2x8xf32>
    %853 = arith.addf %821, %827 : vector<2x8xf32>
    %854 = arith.addf %833, %839 : vector<2x8xf32>
    %855 = arith.addf %845, %851 : vector<2x8xf32>
    %856 = arith.addf %852, %853 : vector<2x8xf32>
    %857 = arith.addf %854, %855 : vector<2x8xf32>
    %858 = arith.addf %856, %857 : vector<2x8xf32>
    %859 = arith.addf %803, %858 : vector<2x8xf32>
    %860 = math.tanh %859 : vector<2x8xf32>
    %861 = vector.extract_strided_slice %569 {offsets = [10, 0], sizes = [2, 8], strides = [1, 1]} : vector<16x8xf32> to vector<2x8xf32>
    %862 = vector.broadcast %17 : vector<1x8xf32> to vector<2x8xf32>
    %863 = arith.mulf %860, %862 : vector<2x8xf32>
    %cst_149 = arith.constant dense<0.000000e+00> : vector<2xf32>
    %864 = vector.multi_reduction <add>, %863, %cst_149 [1] : vector<2x8xf32> to vector<2xf32>
    %865 = vector.shape_cast %864 : vector<2xf32> to vector<2x1xf32>
    %866 = vector.broadcast %865 : vector<2x1xf32> to vector<2x8xf32>
    %867 = arith.mulf %866, %79 : vector<2x8xf32>
    %868 = vector.broadcast %22 : vector<1x8xf32> to vector<2x8xf32>
    %869 = arith.mulf %860, %868 : vector<2x8xf32>
    %cst_150 = arith.constant dense<0.000000e+00> : vector<2xf32>
    %870 = vector.multi_reduction <add>, %869, %cst_150 [1] : vector<2x8xf32> to vector<2xf32>
    %871 = vector.shape_cast %870 : vector<2xf32> to vector<2x1xf32>
    %872 = vector.broadcast %871 : vector<2x1xf32> to vector<2x8xf32>
    %873 = arith.mulf %872, %82 : vector<2x8xf32>
    %874 = vector.broadcast %27 : vector<1x8xf32> to vector<2x8xf32>
    %875 = arith.mulf %860, %874 : vector<2x8xf32>
    %cst_151 = arith.constant dense<0.000000e+00> : vector<2xf32>
    %876 = vector.multi_reduction <add>, %875, %cst_151 [1] : vector<2x8xf32> to vector<2xf32>
    %877 = vector.shape_cast %876 : vector<2xf32> to vector<2x1xf32>
    %878 = vector.broadcast %877 : vector<2x1xf32> to vector<2x8xf32>
    %879 = arith.mulf %878, %85 : vector<2x8xf32>
    %880 = vector.broadcast %32 : vector<1x8xf32> to vector<2x8xf32>
    %881 = arith.mulf %860, %880 : vector<2x8xf32>
    %cst_152 = arith.constant dense<0.000000e+00> : vector<2xf32>
    %882 = vector.multi_reduction <add>, %881, %cst_152 [1] : vector<2x8xf32> to vector<2xf32>
    %883 = vector.shape_cast %882 : vector<2xf32> to vector<2x1xf32>
    %884 = vector.broadcast %883 : vector<2x1xf32> to vector<2x8xf32>
    %885 = arith.mulf %884, %88 : vector<2x8xf32>
    %886 = vector.broadcast %37 : vector<1x8xf32> to vector<2x8xf32>
    %887 = arith.mulf %860, %886 : vector<2x8xf32>
    %cst_153 = arith.constant dense<0.000000e+00> : vector<2xf32>
    %888 = vector.multi_reduction <add>, %887, %cst_153 [1] : vector<2x8xf32> to vector<2xf32>
    %889 = vector.shape_cast %888 : vector<2xf32> to vector<2x1xf32>
    %890 = vector.broadcast %889 : vector<2x1xf32> to vector<2x8xf32>
    %891 = arith.mulf %890, %91 : vector<2x8xf32>
    %892 = vector.broadcast %42 : vector<1x8xf32> to vector<2x8xf32>
    %893 = arith.mulf %860, %892 : vector<2x8xf32>
    %cst_154 = arith.constant dense<0.000000e+00> : vector<2xf32>
    %894 = vector.multi_reduction <add>, %893, %cst_154 [1] : vector<2x8xf32> to vector<2xf32>
    %895 = vector.shape_cast %894 : vector<2xf32> to vector<2x1xf32>
    %896 = vector.broadcast %895 : vector<2x1xf32> to vector<2x8xf32>
    %897 = arith.mulf %896, %94 : vector<2x8xf32>
    %898 = vector.broadcast %47 : vector<1x8xf32> to vector<2x8xf32>
    %899 = arith.mulf %860, %898 : vector<2x8xf32>
    %cst_155 = arith.constant dense<0.000000e+00> : vector<2xf32>
    %900 = vector.multi_reduction <add>, %899, %cst_155 [1] : vector<2x8xf32> to vector<2xf32>
    %901 = vector.shape_cast %900 : vector<2xf32> to vector<2x1xf32>
    %902 = vector.broadcast %901 : vector<2x1xf32> to vector<2x8xf32>
    %903 = arith.mulf %902, %97 : vector<2x8xf32>
    %904 = vector.broadcast %52 : vector<1x8xf32> to vector<2x8xf32>
    %905 = arith.mulf %860, %904 : vector<2x8xf32>
    %cst_156 = arith.constant dense<0.000000e+00> : vector<2xf32>
    %906 = vector.multi_reduction <add>, %905, %cst_156 [1] : vector<2x8xf32> to vector<2xf32>
    %907 = vector.shape_cast %906 : vector<2xf32> to vector<2x1xf32>
    %908 = vector.broadcast %907 : vector<2x1xf32> to vector<2x8xf32>
    %909 = arith.mulf %908, %100 : vector<2x8xf32>
    %910 = arith.addf %867, %873 : vector<2x8xf32>
    %911 = arith.addf %879, %885 : vector<2x8xf32>
    %912 = arith.addf %891, %897 : vector<2x8xf32>
    %913 = arith.addf %903, %909 : vector<2x8xf32>
    %914 = arith.addf %910, %911 : vector<2x8xf32>
    %915 = arith.addf %912, %913 : vector<2x8xf32>
    %916 = arith.addf %914, %915 : vector<2x8xf32>
    %917 = arith.addf %861, %916 : vector<2x8xf32>
    %918 = math.tanh %917 : vector<2x8xf32>
    %919 = vector.extract_strided_slice %569 {offsets = [12, 0], sizes = [2, 8], strides = [1, 1]} : vector<16x8xf32> to vector<2x8xf32>
    %920 = vector.broadcast %17 : vector<1x8xf32> to vector<2x8xf32>
    %921 = arith.mulf %918, %920 : vector<2x8xf32>
    %cst_157 = arith.constant dense<0.000000e+00> : vector<2xf32>
    %922 = vector.multi_reduction <add>, %921, %cst_157 [1] : vector<2x8xf32> to vector<2xf32>
    %923 = vector.shape_cast %922 : vector<2xf32> to vector<2x1xf32>
    %924 = vector.broadcast %923 : vector<2x1xf32> to vector<2x8xf32>
    %925 = arith.mulf %924, %79 : vector<2x8xf32>
    %926 = vector.broadcast %22 : vector<1x8xf32> to vector<2x8xf32>
    %927 = arith.mulf %918, %926 : vector<2x8xf32>
    %cst_158 = arith.constant dense<0.000000e+00> : vector<2xf32>
    %928 = vector.multi_reduction <add>, %927, %cst_158 [1] : vector<2x8xf32> to vector<2xf32>
    %929 = vector.shape_cast %928 : vector<2xf32> to vector<2x1xf32>
    %930 = vector.broadcast %929 : vector<2x1xf32> to vector<2x8xf32>
    %931 = arith.mulf %930, %82 : vector<2x8xf32>
    %932 = vector.broadcast %27 : vector<1x8xf32> to vector<2x8xf32>
    %933 = arith.mulf %918, %932 : vector<2x8xf32>
    %cst_159 = arith.constant dense<0.000000e+00> : vector<2xf32>
    %934 = vector.multi_reduction <add>, %933, %cst_159 [1] : vector<2x8xf32> to vector<2xf32>
    %935 = vector.shape_cast %934 : vector<2xf32> to vector<2x1xf32>
    %936 = vector.broadcast %935 : vector<2x1xf32> to vector<2x8xf32>
    %937 = arith.mulf %936, %85 : vector<2x8xf32>
    %938 = vector.broadcast %32 : vector<1x8xf32> to vector<2x8xf32>
    %939 = arith.mulf %918, %938 : vector<2x8xf32>
    %cst_160 = arith.constant dense<0.000000e+00> : vector<2xf32>
    %940 = vector.multi_reduction <add>, %939, %cst_160 [1] : vector<2x8xf32> to vector<2xf32>
    %941 = vector.shape_cast %940 : vector<2xf32> to vector<2x1xf32>
    %942 = vector.broadcast %941 : vector<2x1xf32> to vector<2x8xf32>
    %943 = arith.mulf %942, %88 : vector<2x8xf32>
    %944 = vector.broadcast %37 : vector<1x8xf32> to vector<2x8xf32>
    %945 = arith.mulf %918, %944 : vector<2x8xf32>
    %cst_161 = arith.constant dense<0.000000e+00> : vector<2xf32>
    %946 = vector.multi_reduction <add>, %945, %cst_161 [1] : vector<2x8xf32> to vector<2xf32>
    %947 = vector.shape_cast %946 : vector<2xf32> to vector<2x1xf32>
    %948 = vector.broadcast %947 : vector<2x1xf32> to vector<2x8xf32>
    %949 = arith.mulf %948, %91 : vector<2x8xf32>
    %950 = vector.broadcast %42 : vector<1x8xf32> to vector<2x8xf32>
    %951 = arith.mulf %918, %950 : vector<2x8xf32>
    %cst_162 = arith.constant dense<0.000000e+00> : vector<2xf32>
    %952 = vector.multi_reduction <add>, %951, %cst_162 [1] : vector<2x8xf32> to vector<2xf32>
    %953 = vector.shape_cast %952 : vector<2xf32> to vector<2x1xf32>
    %954 = vector.broadcast %953 : vector<2x1xf32> to vector<2x8xf32>
    %955 = arith.mulf %954, %94 : vector<2x8xf32>
    %956 = vector.broadcast %47 : vector<1x8xf32> to vector<2x8xf32>
    %957 = arith.mulf %918, %956 : vector<2x8xf32>
    %cst_163 = arith.constant dense<0.000000e+00> : vector<2xf32>
    %958 = vector.multi_reduction <add>, %957, %cst_163 [1] : vector<2x8xf32> to vector<2xf32>
    %959 = vector.shape_cast %958 : vector<2xf32> to vector<2x1xf32>
    %960 = vector.broadcast %959 : vector<2x1xf32> to vector<2x8xf32>
    %961 = arith.mulf %960, %97 : vector<2x8xf32>
    %962 = vector.broadcast %52 : vector<1x8xf32> to vector<2x8xf32>
    %963 = arith.mulf %918, %962 : vector<2x8xf32>
    %cst_164 = arith.constant dense<0.000000e+00> : vector<2xf32>
    %964 = vector.multi_reduction <add>, %963, %cst_164 [1] : vector<2x8xf32> to vector<2xf32>
    %965 = vector.shape_cast %964 : vector<2xf32> to vector<2x1xf32>
    %966 = vector.broadcast %965 : vector<2x1xf32> to vector<2x8xf32>
    %967 = arith.mulf %966, %100 : vector<2x8xf32>
    %968 = arith.addf %925, %931 : vector<2x8xf32>
    %969 = arith.addf %937, %943 : vector<2x8xf32>
    %970 = arith.addf %949, %955 : vector<2x8xf32>
    %971 = arith.addf %961, %967 : vector<2x8xf32>
    %972 = arith.addf %968, %969 : vector<2x8xf32>
    %973 = arith.addf %970, %971 : vector<2x8xf32>
    %974 = arith.addf %972, %973 : vector<2x8xf32>
    %975 = arith.addf %919, %974 : vector<2x8xf32>
    %976 = math.tanh %975 : vector<2x8xf32>
    %977 = vector.extract_strided_slice %569 {offsets = [14, 0], sizes = [2, 8], strides = [1, 1]} : vector<16x8xf32> to vector<2x8xf32>
    %978 = vector.broadcast %17 : vector<1x8xf32> to vector<2x8xf32>
    %979 = arith.mulf %976, %978 : vector<2x8xf32>
    %cst_165 = arith.constant dense<0.000000e+00> : vector<2xf32>
    %980 = vector.multi_reduction <add>, %979, %cst_165 [1] : vector<2x8xf32> to vector<2xf32>
    %981 = vector.shape_cast %980 : vector<2xf32> to vector<2x1xf32>
    %982 = vector.broadcast %981 : vector<2x1xf32> to vector<2x8xf32>
    %983 = arith.mulf %982, %79 : vector<2x8xf32>
    %984 = vector.broadcast %22 : vector<1x8xf32> to vector<2x8xf32>
    %985 = arith.mulf %976, %984 : vector<2x8xf32>
    %cst_166 = arith.constant dense<0.000000e+00> : vector<2xf32>
    %986 = vector.multi_reduction <add>, %985, %cst_166 [1] : vector<2x8xf32> to vector<2xf32>
    %987 = vector.shape_cast %986 : vector<2xf32> to vector<2x1xf32>
    %988 = vector.broadcast %987 : vector<2x1xf32> to vector<2x8xf32>
    %989 = arith.mulf %988, %82 : vector<2x8xf32>
    %990 = vector.broadcast %27 : vector<1x8xf32> to vector<2x8xf32>
    %991 = arith.mulf %976, %990 : vector<2x8xf32>
    %cst_167 = arith.constant dense<0.000000e+00> : vector<2xf32>
    %992 = vector.multi_reduction <add>, %991, %cst_167 [1] : vector<2x8xf32> to vector<2xf32>
    %993 = vector.shape_cast %992 : vector<2xf32> to vector<2x1xf32>
    %994 = vector.broadcast %993 : vector<2x1xf32> to vector<2x8xf32>
    %995 = arith.mulf %994, %85 : vector<2x8xf32>
    %996 = vector.broadcast %32 : vector<1x8xf32> to vector<2x8xf32>
    %997 = arith.mulf %976, %996 : vector<2x8xf32>
    %cst_168 = arith.constant dense<0.000000e+00> : vector<2xf32>
    %998 = vector.multi_reduction <add>, %997, %cst_168 [1] : vector<2x8xf32> to vector<2xf32>
    %999 = vector.shape_cast %998 : vector<2xf32> to vector<2x1xf32>
    %1000 = vector.broadcast %999 : vector<2x1xf32> to vector<2x8xf32>
    %1001 = arith.mulf %1000, %88 : vector<2x8xf32>
    %1002 = vector.broadcast %37 : vector<1x8xf32> to vector<2x8xf32>
    %1003 = arith.mulf %976, %1002 : vector<2x8xf32>
    %cst_169 = arith.constant dense<0.000000e+00> : vector<2xf32>
    %1004 = vector.multi_reduction <add>, %1003, %cst_169 [1] : vector<2x8xf32> to vector<2xf32>
    %1005 = vector.shape_cast %1004 : vector<2xf32> to vector<2x1xf32>
    %1006 = vector.broadcast %1005 : vector<2x1xf32> to vector<2x8xf32>
    %1007 = arith.mulf %1006, %91 : vector<2x8xf32>
    %1008 = vector.broadcast %42 : vector<1x8xf32> to vector<2x8xf32>
    %1009 = arith.mulf %976, %1008 : vector<2x8xf32>
    %cst_170 = arith.constant dense<0.000000e+00> : vector<2xf32>
    %1010 = vector.multi_reduction <add>, %1009, %cst_170 [1] : vector<2x8xf32> to vector<2xf32>
    %1011 = vector.shape_cast %1010 : vector<2xf32> to vector<2x1xf32>
    %1012 = vector.broadcast %1011 : vector<2x1xf32> to vector<2x8xf32>
    %1013 = arith.mulf %1012, %94 : vector<2x8xf32>
    %1014 = vector.broadcast %47 : vector<1x8xf32> to vector<2x8xf32>
    %1015 = arith.mulf %976, %1014 : vector<2x8xf32>
    %cst_171 = arith.constant dense<0.000000e+00> : vector<2xf32>
    %1016 = vector.multi_reduction <add>, %1015, %cst_171 [1] : vector<2x8xf32> to vector<2xf32>
    %1017 = vector.shape_cast %1016 : vector<2xf32> to vector<2x1xf32>
    %1018 = vector.broadcast %1017 : vector<2x1xf32> to vector<2x8xf32>
    %1019 = arith.mulf %1018, %97 : vector<2x8xf32>
    %1020 = vector.broadcast %52 : vector<1x8xf32> to vector<2x8xf32>
    %1021 = arith.mulf %976, %1020 : vector<2x8xf32>
    %cst_172 = arith.constant dense<0.000000e+00> : vector<2xf32>
    %1022 = vector.multi_reduction <add>, %1021, %cst_172 [1] : vector<2x8xf32> to vector<2xf32>
    %1023 = vector.shape_cast %1022 : vector<2xf32> to vector<2x1xf32>
    %1024 = vector.broadcast %1023 : vector<2x1xf32> to vector<2x8xf32>
    %1025 = arith.mulf %1024, %100 : vector<2x8xf32>
    %1026 = arith.addf %983, %989 : vector<2x8xf32>
    %1027 = arith.addf %995, %1001 : vector<2x8xf32>
    %1028 = arith.addf %1007, %1013 : vector<2x8xf32>
    %1029 = arith.addf %1019, %1025 : vector<2x8xf32>
    %1030 = arith.addf %1026, %1027 : vector<2x8xf32>
    %1031 = arith.addf %1028, %1029 : vector<2x8xf32>
    %1032 = arith.addf %1030, %1031 : vector<2x8xf32>
    %1033 = arith.addf %977, %1032 : vector<2x8xf32>
    %1034 = math.tanh %1033 : vector<2x8xf32>
    %1035 = tpu.concatenate %628, %686, %744, %802, %860, %918, %976, %1034 in 0 : vector<2x8xf32>, vector<2x8xf32>, vector<2x8xf32>, vector<2x8xf32>, vector<2x8xf32>, vector<2x8xf32>, vector<2x8xf32>, vector<2x8xf32> -> vector<16x8xf32>
    %c0_173 = arith.constant 0 : index
    %c0_174 = arith.constant 0 : index
    %1036 = vector.load %arg2[%c0_173, %c0_174] : memref<8x4xf32, #tpu.memory_space<vmem>>, vector<8x4xf32>
    %cst_175 = arith.constant dense<0.000000e+00> : vector<16x4xf32>
    %1037 = tpu.matmul %1035, %1036, %cst_175 {dimension_numbers = #tpu.dot_dimension_numbers<[1], [0], [0], [1], [0, 0, 1, 1], [], []>} : vector<16x8xf32>, vector<8x4xf32>, vector<16x4xf32> -> vector<16x4xf32>
    %1038 = vector.broadcast %3 : vector<1x4xf32> to vector<16x4xf32>
    %1039 = arith.addf %1037, %1038 : vector<16x4xf32>
    %c0_176 = arith.constant 0 : index
    %c0_177 = arith.constant 0 : index
    %1040 = vector.load %arg4[%c0_176, %c0_177] : memref<16x4xf32, #tpu.memory_space<vmem>>, vector<16x4xf32>
    tpu.vector_store %arg4[%c0_176, %c0_177], %1039 {strides = array<i32>} : memref<16x4xf32, #tpu.memory_space<vmem>>, vector<16x4xf32>,
    return
  }
}

</mosaic_0001>

<llo_original>
// kernel: model_forward.1
$region0: #{model_forward.1}
  #allocation0 [shape = 'u32[]', space=smem, size = 0x4, offset = 0x4, fixed_abs, tag = 'smem constant byte address 0x4 - core index']
  #allocation1 [shape = 'u32[144,128]{1,0:T(1,128)}', space=vmem, size = 0x12000, scoped, tag = 'internal scratch']
  %s0 = inlined_call_operand.vmem [shape: s32[16,1], index: 0, kind: input, shape index: {}]
  %s1 = inlined_call_operand.vmem [shape: f32[32,8], index: 1, kind: input, shape index: {}]
  %s2 = inlined_call_operand.vmem [shape: f32[8,4], index: 2, kind: input, shape index: {}]
  %s3 = inlined_call_operand.vmem [shape: f32[1,12], index: 3, kind: input, shape index: {}]
  %s4 = inlined_call_operand.vmem [shape: f32[16,4], index: 4, kind: output, shape index: {}]
  %s5 = sld [smem:[#allocation0]]
  $region26: #{model_forward.1} parent=0
    _
  %s7 = ssub.s32 1, %s5
  %s8 = scalar_select 0, %s7, %s5
  // Predicated region
  $region2: #{model_forward.1} parent=0 // pred_check
    _
  $region3: #{model_forward.1} parent=0 // pred_check_branch
    %10 = sbr.rel (0) target = $region5
  $region4: #{model_forward.1} parent=0 // pred_region
    _
  $region5: #{model_forward.1} parent=0 // pred_fallthru
    _
  // Predicated region
  $region6: #{model_forward.1} parent=0 // pred_check
    _
  $region7: #{model_forward.1} parent=0 // pred_check_branch
    %12 = sbr.rel (0) target = $region9
  $region8: #{model_forward.1} parent=0 // pred_region
    _
  $region9: #{model_forward.1} parent=0 // pred_fallthru
    _
  // Predicated region
  $region10: #{model_forward.1} parent=0 // pred_check
    _
  $region11: #{model_forward.1} parent=0 // pred_check_branch
    %14 = sbr.rel (0) target = $region13
  $region12: #{model_forward.1} parent=0 // pred_region
    _
  $region13: #{model_forward.1} parent=0 // pred_fallthru
    _
  // Predicated region
  $region14: #{model_forward.1} parent=0 // pred_check
    _
  $region15: #{model_forward.1} parent=0 // pred_check_branch
    %16 = sbr.rel (0) target = $region17
  $region16: #{model_forward.1} parent=0 // pred_region
    _
  $region17: #{model_forward.1} parent=0 // pred_fallthru
    _
  %v17 = vld [vmem:[%s1] sm:$0xff]
  %v18 = vld [vmem:[%s1 + $0x10] sm:$0xff]
  %v19 = vld [vmem:[%s3] sm:$0x1]
  %v20 = vld [vmem:[%s0] sm:$0xff]
  %v21 = vld [vmem:[%s0 + $0x8] sm:$0xff]
  %v22 = vlaneseq
  %v23 = vand.u32 %v22, 127
  %24 = vset.pattern.permute.xlu0 0
  %25 = vperm.xlu0 %24, %v20
  %v26 = vpop.permute.xlu0 %25
  %27 = vset.pattern.permute.xlu0 0
  %28 = vperm.xlu0 %27, %v21
  %v29 = vpop.permute.xlu0 %28
  %vm30 = vcmp.eq.s32.totalorder %v26, %v23
  %vm31 = vcmp.eq.s32.totalorder %v29, %v23
  %v32 = vsel %vm30, 1.0, 0.0
  %v33 = vsel %vm31, 1.0, 0.0
  %vm34 = vcmask 64512
  %v36 = vsel %vm34, %v32, 0
  %v39 = vsel %vm34, %v33, 0
  %41 = vmatprep.subr.mxu0 0.0
  %42 = vmatpush1.msra.mxu0 %v17
  %43 = vmatprep.subr.mxu0 0.0
  %44 = vmatpush1.msra.mxu0 0.0
  %45 = vmatprep.subr.mxu0 0.0
  %46 = vmatpush1.msra.mxu0 0.0
  %47 = vmatprep.subr.mxu0 0.0
  %48 = vmatpush1.msra.mxu0 0.0
  %49 = vmatprep.subr.mxu0 0.0
  %50 = vmatpush1.msra.mxu0 0.0
  %51 = vmatprep.subr.mxu0 0.0
  %52 = vmatpush1.msra.mxu0 0.0
  %53 = vmatprep.subr.mxu0 0.0
  %54 = vmatpush1.msra.mxu0 0.0
  %55 = vmatprep.subr.mxu0 0.0
  %56 = vmatpush1.msra.mxu0 0.0
  %57 = vmatprep.subr.mxu0 0.0
  %58 = vmatpush1.msra.mxu0 0.0
  %59 = vmatprep.subr.mxu0 0.0
  %60 = vmatpush1.msra.mxu0 0.0
  %61 = vmatprep.subr.mxu0 0.0
  %62 = vmatpush1.msra.mxu0 0.0
  %63 = vmatprep.subr.mxu0 0.0
  %64 = vmatpush1.msra.mxu0 0.0
  %65 = vmatprep.subr.mxu0 0.0
  %66 = vmatpush1.msra.mxu0 0.0
  %67 = vmatprep.subr.mxu0 0.0
  %68 = vmatpush1.msra.mxu0 0.0
  %69 = vmatprep.subr.mxu0 0.0
  %70 = vmatpush1.msra.mxu0 0.0
  %71 = vmatprep.subr.mxu0 0.0
  %72 = vmatpush1.msra.mxu0 0.0
  %73 = vmatprep.subr.mxu0 0.0
  %74 = vmatpush1.msra.mxu0 0.0
  %75 = vmatprep.subr.mxu0 0.0
  %76 = vmatpush1.msra.mxu0 0.0
  %77 = vmatprep.subr.mxu0 0.0
  %78 = vmatpush1.msra.mxu0 0.0
  %79 = vmatprep.subr.mxu0 0.0
  %80 = vmatpush1.msra.mxu0 0.0
  %81 = vmatprep.subr.mxu0 0.0
  %82 = vmatpush1.msra.mxu0 0.0
  %83 = vmatprep.subr.mxu0 0.0
  %84 = vmatpush1.msra.mxu0 0.0
  %85 = vmatprep.subr.mxu0 0.0
  %86 = vmatpush1.msra.mxu0 0.0
  %87 = vmatprep.subr.mxu0 0.0
  %88 = vmatpush1.msra.mxu0 0.0
  %89 = vmatprep.subr.mxu0 0.0
  %90 = vmatpush1.msra.mxu0 0.0
  %91 = vmatprep.subr.mxu0 0.0
  %92 = vmatpush1.msra.mxu0 0.0
  %93 = vmatprep.subr.mxu0 0.0
  %94 = vmatpush1.msra.mxu0 0.0
  %95 = vmatprep.subr.mxu0 0.0
  %96 = vmatpush1.msra.mxu0 0.0
  %97 = vmatprep.subr.mxu0 0.0
  %98 = vmatpush1.msra.mxu0 0.0
  %99 = vmatprep.subr.mxu0 0.0
  %100 = vmatpush1.msra.mxu0 0.0
  %101 = vmatprep.subr.mxu0 0.0
  %102 = vmatpush1.msra.mxu0 0.0
  %103 = vmatprep.subr.mxu0 0.0
  %104 = vmatpush1.msra.mxu0 0.0
  %105 = vmatprep.mubr.f32.mxu0 0.0
  %106 = vmatmul.mubr.f32.gmra.mrb[0].mxu0 %v36
  %v107 = vpop.f32.mrb[0].mxu0
  %v108 = vadd.f32 0.0, %v107
  %v109 = vpop.f32.mrb[0].mxu0
  %110 = vmatprep.mubr.f32.mxu0 0.0
  %111 = vmatmul.mubr.f32.gmra.mrb[0].mxu0 %v39
  %v112 = vpop.f32.mrb[0].mxu0
  %v113 = vadd.f32 0.0, %v112
  %v114 = vpop.f32.mrb[0].mxu0
  %115 = vdwg.mxu0
  %vm116 = vcmp.eq.s32.totalorder %v23, 0
  %v117 = vsel %vm116, 1.0, 0.0
  %vm118 = vcmp.eq.s32.totalorder %v23, 1
  %v119 = vsel %vm118, 1.0, 0.0
  %vm120 = vcmp.eq.s32.totalorder %v23, 2
  %v121 = vsel %vm120, 1.0, 0.0
  %vm122 = vcmp.eq.s32.totalorder %v23, 3
  %v123 = vsel %vm122, 1.0, 0.0
  %vm124 = vcmp.eq.s32.totalorder %v23, 4
  %v125 = vsel %vm124, 1.0, 0.0
  %vm126 = vcmp.eq.s32.totalorder %v23, 5
  %v127 = vsel %vm126, 1.0, 0.0
  %vm128 = vcmp.eq.s32.totalorder %v23, 6
  %v129 = vsel %vm128, 1.0, 0.0
  %vm130 = vcmp.eq.s32.totalorder %v23, 7
  %v131 = vsel %vm130, 1.0, 0.0
  %v132 = vld [vmem:[%s1 + $0x8] sm:$0x1]
  %v133 = vlaneseq
  %v134 = vshrl.u32 %v133, 7
  %v135 = vsub.s32 0, %v134
  %v136 = vrot.slane %v132, %v135
  %v137 = vld [vmem:[%s1 + $0x9] sm:$0x1]
  %v138 = vlaneseq
  %v139 = vshrl.u32 %v138, 7
  %v140 = vsub.s32 0, %v139
  %v141 = vrot.slane %v137, %v140
  %v142 = vld [vmem:[%s1 + $0xa] sm:$0x1]
  %v143 = vlaneseq
  %v144 = vshrl.u32 %v143, 7
  %v145 = vsub.s32 0, %v144
  %v146 = vrot.slane %v142, %v145
  %v147 = vld [vmem:[%s1 + $0xb] sm:$0x1]
  %v148 = vlaneseq
  %v149 = vshrl.u32 %v148, 7
  %v150 = vsub.s32 0, %v149
  %v151 = vrot.slane %v147, %v150
  %v152 = vld [vmem:[%s1 + $0xc] sm:$0x1]
  %v153 = vlaneseq
  %v154 = vshrl.u32 %v153, 7
  %v155 = vsub.s32 0, %v154
  %v156 = vrot.slane %v152, %v155
  %v157 = vld [vmem:[%s1 + $0xd] sm:$0x1]
  %v158 = vlaneseq
  %v159 = vshrl.u32 %v158, 7
  %v160 = vsub.s32 0, %v159
  %v161 = vrot.slane %v157, %v160
  %v162 = vld [vmem:[%s1 + $0xe] sm:$0x1]
  %v163 = vlaneseq
  %v164 = vshrl.u32 %v163, 7
  %v165 = vsub.s32 0, %v164
  %v166 = vrot.slane %v162, %v165
  %v167 = vld [vmem:[%s1 + $0xf] sm:$0x1]
  %v168 = vlaneseq
  %v169 = vshrl.u32 %v168, 7
  %v170 = vsub.s32 0, %v169
  %v171 = vrot.slane %v167, %v170
  %v172 = vld [vmem:[%s1 + $0x18] sm:$0x1]
  %v173 = vlaneseq
  %v174 = vshrl.u32 %v173, 7
  %v175 = vsub.s32 0, %v174
  %v176 = vrot.slane %v172, %v175
  %v177 = vld [vmem:[%s1 + $0x19] sm:$0x1]
  %v178 = vlaneseq
  %v179 = vshrl.u32 %v178, 7
  %v180 = vsub.s32 0, %v179
  %v181 = vrot.slane %v177, %v180
  %v182 = vld [vmem:[%s1 + $0x1a] sm:$0x1]
  %v183 = vlaneseq
  %v184 = vshrl.u32 %v183, 7
  %v185 = vsub.s32 0, %v184
  %v186 = vrot.slane %v182, %v185
  %v187 = vld [vmem:[%s1 + $0x1b] sm:$0x1]
  %v188 = vlaneseq
  %v189 = vshrl.u32 %v188, 7
  %v190 = vsub.s32 0, %v189
  %v191 = vrot.slane %v187, %v190
  %v192 = vld [vmem:[%s1 + $0x1c] sm:$0x1]
  %v193 = vlaneseq
  %v194 = vshrl.u32 %v193, 7
  %v195 = vsub.s32 0, %v194
  %v196 = vrot.slane %v192, %v195
  %v197 = vld [vmem:[%s1 + $0x1d] sm:$0x1]
  %v198 = vlaneseq
  %v199 = vshrl.u32 %v198, 7
  %v200 = vsub.s32 0, %v199
  %v201 = vrot.slane %v197, %v200
  %v202 = vld [vmem:[%s1 + $0x1e] sm:$0x1]
  %v203 = vlaneseq
  %v204 = vshrl.u32 %v203, 7
  %v205 = vsub.s32 0, %v204
  %v206 = vrot.slane %v202, %v205
  %v207 = vld [vmem:[%s1 + $0x1f] sm:$0x1]
  %v208 = vlaneseq
  %v209 = vshrl.u32 %v208, 7
  %v210 = vsub.s32 0, %v209
  %v211 = vrot.slane %v207, %v210
  %v212 = vmul.f32 %v117, 0.0
  %v213 = vsel %vm34, %v212, 0.0
  %214 = vadd.xlane.f32.xlu0 %v213
  %v215 = vpop.xlane.xlu0 %214
  %v216 = vmul.f32 %v215, %v136
  %v217 = vmul.f32 %v119, 0.0
  %v218 = vsel %vm34, %v217, 0.0
  %219 = vadd.xlane.f32.xlu0 %v218
  %v220 = vpop.xlane.xlu0 %219
  %v221 = vmul.f32 %v220, %v141
  %v222 = vmul.f32 %v121, 0.0
  %v223 = vsel %vm34, %v222, 0.0
  %224 = vadd.xlane.f32.xlu0 %v223
  %v225 = vpop.xlane.xlu0 %224
  %v226 = vmul.f32 %v225, %v146
  %v227 = vmul.f32 %v123, 0.0
  %v228 = vsel %vm34, %v227, 0.0
  %229 = vadd.xlane.f32.xlu0 %v228
  %v230 = vpop.xlane.xlu0 %229
  %v231 = vmul.f32 %v230, %v151
  %v232 = vmul.f32 %v125, 0.0
  %v233 = vsel %vm34, %v232, 0.0
  %234 = vadd.xlane.f32.xlu0 %v233
  %v235 = vpop.xlane.xlu0 %234
  %v236 = vmul.f32 %v235, %v156
  %v237 = vmul.f32 %v127, 0.0
  %v238 = vsel %vm34, %v237, 0.0
  %239 = vadd.xlane.f32.xlu0 %v238
  %v240 = vpop.xlane.xlu0 %239
  %v241 = vmul.f32 %v240, %v161
  %v242 = vmul.f32 %v129, 0.0
  %v243 = vsel %vm34, %v242, 0.0
  %244 = vadd.xlane.f32.xlu0 %v243
  %v245 = vpop.xlane.xlu0 %244
  %v246 = vmul.f32 %v245, %v166
  %v247 = vmul.f32 %v131, 0.0
  %v248 = vsel %vm34, %v247, 0.0
  %249 = vadd.xlane.f32.xlu0 %v248
  %v250 = vpop.xlane.xlu0 %249
  %v251 = vmul.f32 %v250, %v171
  %v252 = vadd.f32 %v216, %v221
  %v253 = vadd.f32 %v226, %v231
  %v254 = vadd.f32 %v236, %v241
  %v255 = vadd.f32 %v246, %v251
  %v256 = vadd.f32 %v252, %v253
  %v257 = vadd.f32 %v254, %v255
  %v258 = vadd.f32 %v256, %v257
  %v259 = vadd.f32 %v108, %v258
  %v260 = vtanh.pop %v259
  %v261 = vmul.f32 %v260, %v117
  %vm262 = vcmask 58368
  %v263 = vsel %vm262, %v261, 0.0
  %264 = vadd.xlane.f32.xlu0 %v263
  %v265 = vpop.xlane.xlu0 %264
  %v266 = vmul.f32 %v265, %v136
  %v267 = vmul.f32 %v260, %v119
  %v268 = vsel %vm262, %v267, 0.0
  %269 = vadd.xlane.f32.xlu0 %v268
  %v270 = vpop.xlane.xlu0 %269
  %v271 = vmul.f32 %v270, %v141
  %v272 = vmul.f32 %v260, %v121
  %v273 = vsel %vm262, %v272, 0.0
  %274 = vadd.xlane.f32.xlu0 %v273
  %v275 = vpop.xlane.xlu0 %274
  %v276 = vmul.f32 %v275, %v146
  %v277 = vmul.f32 %v260, %v123
  %v278 = vsel %vm262, %v277, 0.0
  %279 = vadd.xlane.f32.xlu0 %v278
  %v280 = vpop.xlane.xlu0 %279
  %v281 = vmul.f32 %v280, %v151
  %v282 = vmul.f32 %v260, %v125
  %v283 = vsel %vm262, %v282, 0.0
  %284 = vadd.xlane.f32.xlu0 %v283
  %v285 = vpop.xlane.xlu0 %284
  %v286 = vmul.f32 %v285, %v156
  %v287 = vmul.f32 %v260, %v127
  %v288 = vsel %vm262, %v287, 0.0
  %289 = vadd.xlane.f32.xlu0 %v288
  %v290 = vpop.xlane.xlu0 %289
  %v291 = vmul.f32 %v290, %v161
  %v292 = vmul.f32 %v260, %v129
  %v293 = vsel %vm262, %v292, 0.0
  %294 = vadd.xlane.f32.xlu0 %v293
  %v295 = vpop.xlane.xlu0 %294
  %v296 = vmul.f32 %v295, %v166
  %v297 = vmul.f32 %v260, %v131
  %v298 = vsel %vm262, %v297, 0.0
  %299 = vadd.xlane.f32.xlu0 %v298
  %v300 = vpop.xlane.xlu0 %299
  %v301 = vmul.f32 %v300, %v171
  %v302 = vadd.f32 %v266, %v271
  %v303 = vadd.f32 %v276, %v281
  %v304 = vadd.f32 %v286, %v291
  %v305 = vadd.f32 %v296, %v301
  %v306 = vadd.f32 %v302, %v303
  %v307 = vadd.f32 %v304, %v305
  %v308 = vadd.f32 %v306, %v307
  %v310 = vrot.slane %v308, 6
  %v312 = vadd.f32 %v108, %v310
  %v313 = vtanh.pop %v312
  %v314 = vmul.f32 %v313, %v117
  %vm315 = vcmask 60418
  %v316 = vsel %vm315, %v314, 0.0
  %317 = vadd.xlane.f32.xlu0 %v316
  %v318 = vpop.xlane.xlu0 %317
  %v319 = vmul.f32 %v318, %v136
  %v320 = vmul.f32 %v313, %v119
  %v321 = vsel %vm315, %v320, 0.0
  %322 = vadd.xlane.f32.xlu0 %v321
  %v323 = vpop.xlane.xlu0 %322
  %v324 = vmul.f32 %v323, %v141
  %v325 = vmul.f32 %v313, %v121
  %v326 = vsel %vm315, %v325, 0.0
  %327 = vadd.xlane.f32.xlu0 %v326
  %v328 = vpop.xlane.xlu0 %327
  %v329 = vmul.f32 %v328, %v146
  %v330 = vmul.f32 %v313, %v123
  %v331 = vsel %vm315, %v330, 0.0
  %332 = vadd.xlane.f32.xlu0 %v331
  %v333 = vpop.xlane.xlu0 %332
  %v334 = vmul.f32 %v333, %v151
  %v335 = vmul.f32 %v313, %v125
  %v336 = vsel %vm315, %v335, 0.0
  %337 = vadd.xlane.f32.xlu0 %v336
  %v338 = vpop.xlane.xlu0 %337
  %v339 = vmul.f32 %v338, %v156
  %v340 = vmul.f32 %v313, %v127
  %v341 = vsel %vm315, %v340, 0.0
  %342 = vadd.xlane.f32.xlu0 %v341
  %v343 = vpop.xlane.xlu0 %342
  %v344 = vmul.f32 %v343, %v161
  %v345 = vmul.f32 %v313, %v129
  %v346 = vsel %vm315, %v345, 0.0
  %347 = vadd.xlane.f32.xlu0 %v346
  %v348 = vpop.xlane.xlu0 %347
  %v349 = vmul.f32 %v348, %v166
  %v350 = vmul.f32 %v313, %v131
  %v351 = vsel %vm315, %v350, 0.0
  %352 = vadd.xlane.f32.xlu0 %v351
  %v353 = vpop.xlane.xlu0 %352
  %v354 = vmul.f32 %v353, %v171
  %v355 = vadd.f32 %v319, %v324
  %v356 = vadd.f32 %v329, %v334
  %v357 = vadd.f32 %v339, %v344
  %v358 = vadd.f32 %v349, %v354
  %v359 = vadd.f32 %v355, %v356
  %v360 = vadd.f32 %v357, %v358
  %v361 = vadd.f32 %v359, %v360
  %v363 = vrot.slane %v361, 6
  %v365 = vadd.f32 %v108, %v363
  %v366 = vtanh.pop %v365
  %v367 = vmul.f32 %v366, %v117
  %vm368 = vcmask 62468
  %v369 = vsel %vm368, %v367, 0.0
  %370 = vadd.xlane.f32.xlu0 %v369
  %v371 = vpop.xlane.xlu0 %370
  %v372 = vmul.f32 %v371, %v136
  %v373 = vmul.f32 %v366, %v119
  %v374 = vsel %vm368, %v373, 0.0
  %375 = vadd.xlane.f32.xlu0 %v374
  %v376 = vpop.xlane.xlu0 %375
  %v377 = vmul.f32 %v376, %v141
  %v378 = vmul.f32 %v366, %v121
  %v379 = vsel %vm368, %v378, 0.0
  %380 = vadd.xlane.f32.xlu0 %v379
  %v381 = vpop.xlane.xlu0 %380
  %v382 = vmul.f32 %v381, %v146
  %v383 = vmul.f32 %v366, %v123
  %v384 = vsel %vm368, %v383, 0.0
  %385 = vadd.xlane.f32.xlu0 %v384
  %v386 = vpop.xlane.xlu0 %385
  %v387 = vmul.f32 %v386, %v151
  %v388 = vmul.f32 %v366, %v125
  %v389 = vsel %vm368, %v388, 0.0
  %390 = vadd.xlane.f32.xlu0 %v389
  %v391 = vpop.xlane.xlu0 %390
  %v392 = vmul.f32 %v391, %v156
  %v393 = vmul.f32 %v366, %v127
  %v394 = vsel %vm368, %v393, 0.0
  %395 = vadd.xlane.f32.xlu0 %v394
  %v396 = vpop.xlane.xlu0 %395
  %v397 = vmul.f32 %v396, %v161
  %v398 = vmul.f32 %v366, %v129
  %v399 = vsel %vm368, %v398, 0.0
  %400 = vadd.xlane.f32.xlu0 %v399
  %v401 = vpop.xlane.xlu0 %400
  %v402 = vmul.f32 %v401, %v166
  %v403 = vmul.f32 %v366, %v131
  %v404 = vsel %vm368, %v403, 0.0
  %405 = vadd.xlane.f32.xlu0 %v404
  %v406 = vpop.xlane.xlu0 %405
  %v407 = vmul.f32 %v406, %v171
  %v408 = vadd.f32 %v372, %v377
  %v409 = vadd.f32 %v382, %v387
  %v410 = vadd.f32 %v392, %v397
  %v411 = vadd.f32 %v402, %v407
  %v412 = vadd.f32 %v408, %v409
  %v413 = vadd.f32 %v410, %v411
  %v414 = vadd.f32 %v412, %v413
  %v416 = vrot.slane %v414, 6
  %v418 = vadd.f32 %v108, %v416
  %v419 = vtanh.pop %v418
  %v420 = vmul.f32 %v419, %v117
  %vm421 = vcmask 64518
  %v422 = vsel %vm421, %v420, 0.0
  %423 = vadd.xlane.f32.xlu0 %v422
  %v424 = vpop.xlane.xlu0 %423
  %v425 = vmul.f32 %v424, %v136
  %v426 = vmul.f32 %v419, %v119
  %v427 = vsel %vm421, %v426, 0.0
  %428 = vadd.xlane.f32.xlu0 %v427
  %v429 = vpop.xlane.xlu0 %428
  %v430 = vmul.f32 %v429, %v141
  %v431 = vmul.f32 %v419, %v121
  %v432 = vsel %vm421, %v431, 0.0
  %433 = vadd.xlane.f32.xlu0 %v432
  %v434 = vpop.xlane.xlu0 %433
  %v435 = vmul.f32 %v434, %v146
  %v436 = vmul.f32 %v419, %v123
  %v437 = vsel %vm421, %v436, 0.0
  %438 = vadd.xlane.f32.xlu0 %v437
  %v439 = vpop.xlane.xlu0 %438
  %v440 = vmul.f32 %v439, %v151
  %v441 = vmul.f32 %v419, %v125
  %v442 = vsel %vm421, %v441, 0.0
  %443 = vadd.xlane.f32.xlu0 %v442
  %v444 = vpop.xlane.xlu0 %443
  %v445 = vmul.f32 %v444, %v156
  %v446 = vmul.f32 %v419, %v127
  %v447 = vsel %vm421, %v446, 0.0
  %448 = vadd.xlane.f32.xlu0 %v447
  %v449 = vpop.xlane.xlu0 %448
  %v450 = vmul.f32 %v449, %v161
  %v451 = vmul.f32 %v419, %v129
  %v452 = vsel %vm421, %v451, 0.0
  %453 = vadd.xlane.f32.xlu0 %v452
  %v454 = vpop.xlane.xlu0 %453
  %v455 = vmul.f32 %v454, %v166
  %v456 = vmul.f32 %v419, %v131
  %v457 = vsel %vm421, %v456, 0.0
  %458 = vadd.xlane.f32.xlu0 %v457
  %v459 = vpop.xlane.xlu0 %458
  %v460 = vmul.f32 %v459, %v171
  %v461 = vadd.f32 %v425, %v430
  %v462 = vadd.f32 %v435, %v440
  %v463 = vadd.f32 %v445, %v450
  %v464 = vadd.f32 %v455, %v460
  %v465 = vadd.f32 %v461, %v462
  %v466 = vadd.f32 %v463, %v464
  %v467 = vadd.f32 %v465, %v466
  %v469 = vrot.slane %v467, 6
  %v471 = vadd.f32 %v113, %v469
  %v472 = vtanh.pop %v471
  %v473 = vmul.f32 %v472, %v117
  %v474 = vsel %vm262, %v473, 0.0
  %475 = vadd.xlane.f32.xlu0 %v474
  %v476 = vpop.xlane.xlu0 %475
  %v477 = vmul.f32 %v476, %v136
  %v478 = vmul.f32 %v472, %v119
  %v479 = vsel %vm262, %v478, 0.0
  %480 = vadd.xlane.f32.xlu0 %v479
  %v481 = vpop.xlane.xlu0 %480
  %v482 = vmul.f32 %v481, %v141
  %v483 = vmul.f32 %v472, %v121
  %v484 = vsel %vm262, %v483, 0.0
  %485 = vadd.xlane.f32.xlu0 %v484
  %v486 = vpop.xlane.xlu0 %485
  %v487 = vmul.f32 %v486, %v146
  %v488 = vmul.f32 %v472, %v123
  %v489 = vsel %vm262, %v488, 0.0
  %490 = vadd.xlane.f32.xlu0 %v489
  %v491 = vpop.xlane.xlu0 %490
  %v492 = vmul.f32 %v491, %v151
  %v493 = vmul.f32 %v472, %v125
  %v494 = vsel %vm262, %v493, 0.0
  %495 = vadd.xlane.f32.xlu0 %v494
  %v496 = vpop.xlane.xlu0 %495
  %v497 = vmul.f32 %v496, %v156
  %v498 = vmul.f32 %v472, %v127
  %v499 = vsel %vm262, %v498, 0.0
  %500 = vadd.xlane.f32.xlu0 %v499
  %v501 = vpop.xlane.xlu0 %500
  %v502 = vmul.f32 %v501, %v161
  %v503 = vmul.f32 %v472, %v129
  %v504 = vsel %vm262, %v503, 0.0
  %505 = vadd.xlane.f32.xlu0 %v504
  %v506 = vpop.xlane.xlu0 %505
  %v507 = vmul.f32 %v506, %v166
  %v508 = vmul.f32 %v472, %v131
  %v509 = vsel %vm262, %v508, 0.0
  %510 = vadd.xlane.f32.xlu0 %v509
  %v511 = vpop.xlane.xlu0 %510
  %v512 = vmul.f32 %v511, %v171
  %v513 = vadd.f32 %v477, %v482
  %v514 = vadd.f32 %v487, %v492
  %v515 = vadd.f32 %v497, %v502
  %v516 = vadd.f32 %v507, %v512
  %v517 = vadd.f32 %v513, %v514
  %v518 = vadd.f32 %v515, %v516
  %v519 = vadd.f32 %v517, %v518
  %v521 = vrot.slane %v519, 6
  %v523 = vadd.f32 %v113, %v521
  %v524 = vtanh.pop %v523
  %v525 = vmul.f32 %v524, %v117
  %v526 = vsel %vm315, %v525, 0.0
  %527 = vadd.xlane.f32.xlu0 %v526
  %v528 = vpop.xlane.xlu0 %527
  %v529 = vmul.f32 %v528, %v136
  %v530 = vmul.f32 %v524, %v119
  %v531 = vsel %vm315, %v530, 0.0
  %532 = vadd.xlane.f32.xlu0 %v531
  %v533 = vpop.xlane.xlu0 %532
  %v534 = vmul.f32 %v533, %v141
  %v535 = vmul.f32 %v524, %v121
  %v536 = vsel %vm315, %v535, 0.0
  %537 = vadd.xlane.f32.xlu0 %v536
  %v538 = vpop.xlane.xlu0 %537
  %v539 = vmul.f32 %v538, %v146
  %v540 = vmul.f32 %v524, %v123
  %v541 = vsel %vm315, %v540, 0.0
  %542 = vadd.xlane.f32.xlu0 %v541
  %v543 = vpop.xlane.xlu0 %542
  %v544 = vmul.f32 %v543, %v151
  %v545 = vmul.f32 %v524, %v125
  %v546 = vsel %vm315, %v545, 0.0
  %547 = vadd.xlane.f32.xlu0 %v546
  %v548 = vpop.xlane.xlu0 %547
  %v549 = vmul.f32 %v548, %v156
  %v550 = vmul.f32 %v524, %v127
  %v551 = vsel %vm315, %v550, 0.0
  %552 = vadd.xlane.f32.xlu0 %v551
  %v553 = vpop.xlane.xlu0 %552
  %v554 = vmul.f32 %v553, %v161
  %v555 = vmul.f32 %v524, %v129
  %v556 = vsel %vm315, %v555, 0.0
  %557 = vadd.xlane.f32.xlu0 %v556
  %v558 = vpop.xlane.xlu0 %557
  %v559 = vmul.f32 %v558, %v166
  %v560 = vmul.f32 %v524, %v131
  %v561 = vsel %vm315, %v560, 0.0
  %562 = vadd.xlane.f32.xlu0 %v561
  %v563 = vpop.xlane.xlu0 %562
  %v564 = vmul.f32 %v563, %v171
  %v565 = vadd.f32 %v529, %v534
  %v566 = vadd.f32 %v539, %v544
  %v567 = vadd.f32 %v549, %v554
  %v568 = vadd.f32 %v559, %v564
  %v569 = vadd.f32 %v565, %v566
  %v570 = vadd.f32 %v567, %v568
  %v571 = vadd.f32 %v569, %v570
  %v573 = vrot.slane %v571, 6
  %v575 = vadd.f32 %v113, %v573
  %v576 = vtanh.pop %v575
  %v577 = vmul.f32 %v576, %v117
  %v578 = vsel %vm368, %v577, 0.0
  %579 = vadd.xlane.f32.xlu0 %v578
  %v580 = vpop.xlane.xlu0 %579
  %v581 = vmul.f32 %v580, %v136
  %v582 = vmul.f32 %v576, %v119
  %v583 = vsel %vm368, %v582, 0.0
  %584 = vadd.xlane.f32.xlu0 %v583
  %v585 = vpop.xlane.xlu0 %584
  %v586 = vmul.f32 %v585, %v141
  %v587 = vmul.f32 %v576, %v121
  %v588 = vsel %vm368, %v587, 0.0
  %589 = vadd.xlane.f32.xlu0 %v588
  %v590 = vpop.xlane.xlu0 %589
  %v591 = vmul.f32 %v590, %v146
  %v592 = vmul.f32 %v576, %v123
  %v593 = vsel %vm368, %v592, 0.0
  %594 = vadd.xlane.f32.xlu0 %v593
  %v595 = vpop.xlane.xlu0 %594
  %v596 = vmul.f32 %v595, %v151
  %v597 = vmul.f32 %v576, %v125
  %v598 = vsel %vm368, %v597, 0.0
  %599 = vadd.xlane.f32.xlu0 %v598
  %v600 = vpop.xlane.xlu0 %599
  %v601 = vmul.f32 %v600, %v156
  %v602 = vmul.f32 %v576, %v127
  %v603 = vsel %vm368, %v602, 0.0
  %604 = vadd.xlane.f32.xlu0 %v603
  %v605 = vpop.xlane.xlu0 %604
  %v606 = vmul.f32 %v605, %v161
  %v607 = vmul.f32 %v576, %v129
  %v608 = vsel %vm368, %v607, 0.0
  %609 = vadd.xlane.f32.xlu0 %v608
  %v610 = vpop.xlane.xlu0 %609
  %v611 = vmul.f32 %v610, %v166
  %v612 = vmul.f32 %v576, %v131
  %v613 = vsel %vm368, %v612, 0.0
  %614 = vadd.xlane.f32.xlu0 %v613
  %v615 = vpop.xlane.xlu0 %614
  %v616 = vmul.f32 %v615, %v171
  %v617 = vadd.f32 %v581, %v586
  %v618 = vadd.f32 %v591, %v596
  %v619 = vadd.f32 %v601, %v606
  %v620 = vadd.f32 %v611, %v616
  %v621 = vadd.f32 %v617, %v618
  %v622 = vadd.f32 %v619, %v620
  %v623 = vadd.f32 %v621, %v622
  %v625 = vrot.slane %v623, 6
  %v627 = vadd.f32 %v113, %v625
  %v628 = vtanh.pop %v627
  %vm629 = vcmask 1041408
  %v630 = vsel %vm629, %v260, %v313
  %vm631 = vcmask 1043456
  %v632 = vsel %vm631, %v630, %v366
  %vm633 = vcmask 1045504
  %v634 = vsel %vm633, %v632, %v419
  %v635 = vsel %vm629, %v472, %v524
  %v636 = vsel %vm631, %v635, %v576
  %v637 = vsel %vm633, %v636, %v628
  %v639 = vlaneseq
  %v640 = vshrl.u32 %v639, 7
  %v641 = vsub.s32 0, %v640
  %v642 = vrot.slane %v19, %v641
  %v645 = vsel %vm34, %v634, 0
  %v648 = vsel %vm34, %v637, 0
  %650 = vmatprep.subr.mxu0 0.0
  %651 = vmatpush1.msra.mxu0 %v18
  %652 = vmatprep.subr.mxu0 0.0
  %653 = vmatpush1.msra.mxu0 0.0
  %654 = vmatprep.subr.mxu0 0.0
  %655 = vmatpush1.msra.mxu0 0.0
  %656 = vmatprep.subr.mxu0 0.0
  %657 = vmatpush1.msra.mxu0 0.0
  %658 = vmatprep.subr.mxu0 0.0
  %659 = vmatpush1.msra.mxu0 0.0
  %660 = vmatprep.subr.mxu0 0.0
  %661 = vmatpush1.msra.mxu0 0.0
  %662 = vmatprep.subr.mxu0 0.0
  %663 = vmatpush1.msra.mxu0 0.0
  %664 = vmatprep.subr.mxu0 0.0
  %665 = vmatpush1.msra.mxu0 0.0
  %666 = vmatprep.subr.mxu0 0.0
  %667 = vmatpush1.msra.mxu0 0.0
  %668 = vmatprep.subr.mxu0 0.0
  %669 = vmatpush1.msra.mxu0 0.0
  %670 = vmatprep.subr.mxu0 0.0
  %671 = vmatpush1.msra.mxu0 0.0
  %672 = vmatprep.subr.mxu0 0.0
  %673 = vmatpush1.msra.mxu0 0.0
  %674 = vmatprep.subr.mxu0 0.0
  %675 = vmatpush1.msra.mxu0 0.0
  %676 = vmatprep.subr.mxu0 0.0
  %677 = vmatpush1.msra.mxu0 0.0
  %678 = vmatprep.subr.mxu0 0.0
  %679 = vmatpush1.msra.mxu0 0.0
  %680 = vmatprep.subr.mxu0 0.0
  %681 = vmatpush1.msra.mxu0 0.0
  %682 = vmatprep.subr.mxu0 0.0
  %683 = vmatpush1.msra.mxu0 0.0
  %684 = vmatprep.subr.mxu0 0.0
  %685 = vmatpush1.msra.mxu0 0.0
  %686 = vmatprep.subr.mxu0 0.0
  %687 = vmatpush1.msra.mxu0 0.0
  %688 = vmatprep.subr.mxu0 0.0
  %689 = vmatpush1.msra.mxu0 0.0
  %690 = vmatprep.subr.mxu0 0.0
  %691 = vmatpush1.msra.mxu0 0.0
  %692 = vmatprep.subr.mxu0 0.0
  %693 = vmatpush1.msra.mxu0 0.0
  %694 = vmatprep.subr.mxu0 0.0
  %695 = vmatpush1.msra.mxu0 0.0
  %696 = vmatprep.subr.mxu0 0.0
  %697 = vmatpush1.msra.mxu0 0.0
  %698 = vmatprep.subr.mxu0 0.0
  %699 = vmatpush1.msra.mxu0 0.0
  %700 = vmatprep.subr.mxu0 0.0
  %701 = vmatpush1.msra.mxu0 0.0
  %702 = vmatprep.subr.mxu0 0.0
  %703 = vmatpush1.msra.mxu0 0.0
  %704 = vmatprep.subr.mxu0 0.0
  %705 = vmatpush1.msra.mxu0 0.0
  %706 = vmatprep.subr.mxu0 0.0
  %707 = vmatpush1.msra.mxu0 0.0
  %708 = vmatprep.subr.mxu0 0.0
  %709 = vmatpush1.msra.mxu0 0.0
  %710 = vmatprep.subr.mxu0 0.0
  %711 = vmatpush1.msra.mxu0 0.0
  %712 = vmatprep.subr.mxu0 0.0
  %713 = vmatpush1.msra.mxu0 0.0
  %714 = vmatprep.mubr.f32.mxu0 0.0
  %715 = vmatmul.mubr.f32.gmra.mrb[0].mxu0 %v645
  %v716 = vpop.f32.mrb[0].mxu0
  %v717 = vadd.f32 %v642, %v716
  %v718 = vpop.f32.mrb[0].mxu0
  %719 = vmatprep.mubr.f32.mxu0 0.0
  %720 = vmatmul.mubr.f32.gmra.mrb[0].mxu0 %v648
  %v721 = vpop.f32.mrb[0].mxu0
  %v722 = vadd.f32 %v642, %v721
  %v723 = vpop.f32.mrb[0].mxu0
  %724 = vdwg.mxu0
  %v725 = vmul.f32 %v215, %v176
  %v726 = vmul.f32 %v220, %v181
  %v727 = vmul.f32 %v225, %v186
  %v728 = vmul.f32 %v230, %v191
  %v729 = vmul.f32 %v235, %v196
  %v730 = vmul.f32 %v240, %v201
  %v731 = vmul.f32 %v245, %v206
  %v732 = vmul.f32 %v250, %v211
  %v733 = vadd.f32 %v725, %v726
  %v734 = vadd.f32 %v727, %v728
  %v735 = vadd.f32 %v729, %v730
  %v736 = vadd.f32 %v731, %v732
  %v737 = vadd.f32 %v733, %v734
  %v738 = vadd.f32 %v735, %v736
  %v739 = vadd.f32 %v737, %v738
  %v740 = vadd.f32 %v717, %v739
  %v741 = vtanh.pop %v740
  %v742 = vmul.f32 %v741, %v117
  %v743 = vsel %vm262, %v742, 0.0
  %744 = vadd.xlane.f32.xlu0 %v743
  %v745 = vpop.xlane.xlu0 %744
  %v746 = vmul.f32 %v745, %v176
  %v747 = vmul.f32 %v741, %v119
  %v748 = vsel %vm262, %v747, 0.0
  %749 = vadd.xlane.f32.xlu0 %v748
  %v750 = vpop.xlane.xlu0 %749
  %v751 = vmul.f32 %v750, %v181
  %v752 = vmul.f32 %v741, %v121
  %v753 = vsel %vm262, %v752, 0.0
  %754 = vadd.xlane.f32.xlu0 %v753
  %v755 = vpop.xlane.xlu0 %754
  %v756 = vmul.f32 %v755, %v186
  %v757 = vmul.f32 %v741, %v123
  %v758 = vsel %vm262, %v757, 0.0
  %759 = vadd.xlane.f32.xlu0 %v758
  %v760 = vpop.xlane.xlu0 %759
  %v761 = vmul.f32 %v760, %v191
  %v762 = vmul.f32 %v741, %v125
  %v763 = vsel %vm262, %v762, 0.0
  %764 = vadd.xlane.f32.xlu0 %v763
  %v765 = vpop.xlane.xlu0 %764
  %v766 = vmul.f32 %v765, %v196
  %v767 = vmul.f32 %v741, %v127
  %v768 = vsel %vm262, %v767, 0.0
  %769 = vadd.xlane.f32.xlu0 %v768
  %v770 = vpop.xlane.xlu0 %769
  %v771 = vmul.f32 %v770, %v201
  %v772 = vmul.f32 %v741, %v129
  %v773 = vsel %vm262, %v772, 0.0
  %774 = vadd.xlane.f32.xlu0 %v773
  %v775 = vpop.xlane.xlu0 %774
  %v776 = vmul.f32 %v775, %v206
  %v777 = vmul.f32 %v741, %v131
  %v778 = vsel %vm262, %v777, 0.0
  %779 = vadd.xlane.f32.xlu0 %v778
  %v780 = vpop.xlane.xlu0 %779
  %v781 = vmul.f32 %v780, %v211
  %v782 = vadd.f32 %v746, %v751
  %v783 = vadd.f32 %v756, %v761
  %v784 = vadd.f32 %v766, %v771
  %v785 = vadd.f32 %v776, %v781
  %v786 = vadd.f32 %v782, %v783
  %v787 = vadd.f32 %v784, %v785
  %v788 = vadd.f32 %v786, %v787
  %v790 = vrot.slane %v788, 6
  %v792 = vadd.f32 %v717, %v790
  %v793 = vtanh.pop %v792
  %v794 = vmul.f32 %v793, %v117
  %v795 = vsel %vm315, %v794, 0.0
  %796 = vadd.xlane.f32.xlu0 %v795
  %v797 = vpop.xlane.xlu0 %796
  %v798 = vmul.f32 %v797, %v176
  %v799 = vmul.f32 %v793, %v119
  %v800 = vsel %vm315, %v799, 0.0
  %801 = vadd.xlane.f32.xlu0 %v800
  %v802 = vpop.xlane.xlu0 %801
  %v803 = vmul.f32 %v802, %v181
  %v804 = vmul.f32 %v793, %v121
  %v805 = vsel %vm315, %v804, 0.0
  %806 = vadd.xlane.f32.xlu0 %v805
  %v807 = vpop.xlane.xlu0 %806
  %v808 = vmul.f32 %v807, %v186
  %v809 = vmul.f32 %v793, %v123
  %v810 = vsel %vm315, %v809, 0.0
  %811 = vadd.xlane.f32.xlu0 %v810
  %v812 = vpop.xlane.xlu0 %811
  %v813 = vmul.f32 %v812, %v191
  %v814 = vmul.f32 %v793, %v125
  %v815 = vsel %vm315, %v814, 0.0
  %816 = vadd.xlane.f32.xlu0 %v815
  %v817 = vpop.xlane.xlu0 %816
  %v818 = vmul.f32 %v817, %v196
  %v819 = vmul.f32 %v793, %v127
  %v820 = vsel %vm315, %v819, 0.0
  %821 = vadd.xlane.f32.xlu0 %v820
  %v822 = vpop.xlane.xlu0 %821
  %v823 = vmul.f32 %v822, %v201
  %v824 = vmul.f32 %v793, %v129
  %v825 = vsel %vm315, %v824, 0.0
  %826 = vadd.xlane.f32.xlu0 %v825
  %v827 = vpop.xlane.xlu0 %826
  %v828 = vmul.f32 %v827, %v206
  %v829 = vmul.f32 %v793, %v131
  %v830 = vsel %vm315, %v829, 0.0
  %831 = vadd.xlane.f32.xlu0 %v830
  %v832 = vpop.xlane.xlu0 %831
  %v833 = vmul.f32 %v832, %v211
  %v834 = vadd.f32 %v798, %v803
  %v835 = vadd.f32 %v808, %v813
  %v836 = vadd.f32 %v818, %v823
  %v837 = vadd.f32 %v828, %v833
  %v838 = vadd.f32 %v834, %v835
  %v839 = vadd.f32 %v836, %v837
  %v840 = vadd.f32 %v838, %v839
  %v842 = vrot.slane %v840, 6
  %v844 = vadd.f32 %v717, %v842
  %v845 = vtanh.pop %v844
  %v846 = vmul.f32 %v845, %v117
  %v847 = vsel %vm368, %v846, 0.0
  %848 = vadd.xlane.f32.xlu0 %v847
  %v849 = vpop.xlane.xlu0 %848
  %v850 = vmul.f32 %v849, %v176
  %v851 = vmul.f32 %v845, %v119
  %v852 = vsel %vm368, %v851, 0.0
  %853 = vadd.xlane.f32.xlu0 %v852
  %v854 = vpop.xlane.xlu0 %853
  %v855 = vmul.f32 %v854, %v181
  %v856 = vmul.f32 %v845, %v121
  %v857 = vsel %vm368, %v856, 0.0
  %858 = vadd.xlane.f32.xlu0 %v857
  %v859 = vpop.xlane.xlu0 %858
  %v860 = vmul.f32 %v859, %v186
  %v861 = vmul.f32 %v845, %v123
  %v862 = vsel %vm368, %v861, 0.0
  %863 = vadd.xlane.f32.xlu0 %v862
  %v864 = vpop.xlane.xlu0 %863
  %v865 = vmul.f32 %v864, %v191
  %v866 = vmul.f32 %v845, %v125
  %v867 = vsel %vm368, %v866, 0.0
  %868 = vadd.xlane.f32.xlu0 %v867
  %v869 = vpop.xlane.xlu0 %868
  %v870 = vmul.f32 %v869, %v196
  %v871 = vmul.f32 %v845, %v127
  %v872 = vsel %vm368, %v871, 0.0
  %873 = vadd.xlane.f32.xlu0 %v872
  %v874 = vpop.xlane.xlu0 %873
  %v875 = vmul.f32 %v874, %v201
  %v876 = vmul.f32 %v845, %v129
  %v877 = vsel %vm368, %v876, 0.0
  %878 = vadd.xlane.f32.xlu0 %v877
  %v879 = vpop.xlane.xlu0 %878
  %v880 = vmul.f32 %v879, %v206
  %v881 = vmul.f32 %v845, %v131
  %v882 = vsel %vm368, %v881, 0.0
  %883 = vadd.xlane.f32.xlu0 %v882
  %v884 = vpop.xlane.xlu0 %883
  %v885 = vmul.f32 %v884, %v211
  %v886 = vadd.f32 %v850, %v855
  %v887 = vadd.f32 %v860, %v865
  %v888 = vadd.f32 %v870, %v875
  %v889 = vadd.f32 %v880, %v885
  %v890 = vadd.f32 %v886, %v887
  %v891 = vadd.f32 %v888, %v889
  %v892 = vadd.f32 %v890, %v891
  %v894 = vrot.slane %v892, 6
  %v896 = vadd.f32 %v717, %v894
  %v897 = vtanh.pop %v896
  %v898 = vmul.f32 %v897, %v117
  %v899 = vsel %vm421, %v898, 0.0
  %900 = vadd.xlane.f32.xlu0 %v899
  %v901 = vpop.xlane.xlu0 %900
  %v902 = vmul.f32 %v901, %v176
  %v903 = vmul.f32 %v897, %v119
  %v904 = vsel %vm421, %v903, 0.0
  %905 = vadd.xlane.f32.xlu0 %v904
  %v906 = vpop.xlane.xlu0 %905
  %v907 = vmul.f32 %v906, %v181
  %v908 = vmul.f32 %v897, %v121
  %v909 = vsel %vm421, %v908, 0.0
  %910 = vadd.xlane.f32.xlu0 %v909
  %v911 = vpop.xlane.xlu0 %910
  %v912 = vmul.f32 %v911, %v186
  %v913 = vmul.f32 %v897, %v123
  %v914 = vsel %vm421, %v913, 0.0
  %915 = vadd.xlane.f32.xlu0 %v914
  %v916 = vpop.xlane.xlu0 %915
  %v917 = vmul.f32 %v916, %v191
  %v918 = vmul.f32 %v897, %v125
  %v919 = vsel %vm421, %v918, 0.0
  %920 = vadd.xlane.f32.xlu0 %v919
  %v921 = vpop.xlane.xlu0 %920
  %v922 = vmul.f32 %v921, %v196
  %v923 = vmul.f32 %v897, %v127
  %v924 = vsel %vm421, %v923, 0.0
  %925 = vadd.xlane.f32.xlu0 %v924
  %v926 = vpop.xlane.xlu0 %925
  %v927 = vmul.f32 %v926, %v201
  %v928 = vmul.f32 %v897, %v129
  %v929 = vsel %vm421, %v928, 0.0
  %930 = vadd.xlane.f32.xlu0 %v929
  %v931 = vpop.xlane.xlu0 %930
  %v932 = vmul.f32 %v931, %v206
  %v933 = vmul.f32 %v897, %v131
  %v934 = vsel %vm421, %v933, 0.0
  %935 = vadd.xlane.f32.xlu0 %v934
  %v936 = vpop.xlane.xlu0 %935
  %v937 = vmul.f32 %v936, %v211
  %v938 = vadd.f32 %v902, %v907
  %v939 = vadd.f32 %v912, %v917
  %v940 = vadd.f32 %v922, %v927
  %v941 = vadd.f32 %v932, %v937
  %v942 = vadd.f32 %v938, %v939
  %v943 = vadd.f32 %v940, %v941
  %v944 = vadd.f32 %v942, %v943
  %v946 = vrot.slane %v944, 6
  %v948 = vadd.f32 %v722, %v946
  %v949 = vtanh.pop %v948
  %v950 = vmul.f32 %v949, %v117
  %v951 = vsel %vm262, %v950, 0.0
  %952 = vadd.xlane.f32.xlu0 %v951
  %v953 = vpop.xlane.xlu0 %952
  %v954 = vmul.f32 %v953, %v176
  %v955 = vmul.f32 %v949, %v119
  %v956 = vsel %vm262, %v955, 0.0
  %957 = vadd.xlane.f32.xlu0 %v956
  %v958 = vpop.xlane.xlu0 %957
  %v959 = vmul.f32 %v958, %v181
  %v960 = vmul.f32 %v949, %v121
  %v961 = vsel %vm262, %v960, 0.0
  %962 = vadd.xlane.f32.xlu0 %v961
  %v963 = vpop.xlane.xlu0 %962
  %v964 = vmul.f32 %v963, %v186
  %v965 = vmul.f32 %v949, %v123
  %v966 = vsel %vm262, %v965, 0.0
  %967 = vadd.xlane.f32.xlu0 %v966
  %v968 = vpop.xlane.xlu0 %967
  %v969 = vmul.f32 %v968, %v191
  %v970 = vmul.f32 %v949, %v125
  %v971 = vsel %vm262, %v970, 0.0
  %972 = vadd.xlane.f32.xlu0 %v971
  %v973 = vpop.xlane.xlu0 %972
  %v974 = vmul.f32 %v973, %v196
  %v975 = vmul.f32 %v949, %v127
  %v976 = vsel %vm262, %v975, 0.0
  %977 = vadd.xlane.f32.xlu0 %v976
  %v978 = vpop.xlane.xlu0 %977
  %v979 = vmul.f32 %v978, %v201
  %v980 = vmul.f32 %v949, %v129
  %v981 = vsel %vm262, %v980, 0.0
  %982 = vadd.xlane.f32.xlu0 %v981
  %v983 = vpop.xlane.xlu0 %982
  %v984 = vmul.f32 %v983, %v206
  %v985 = vmul.f32 %v949, %v131
  %v986 = vsel %vm262, %v985, 0.0
  %987 = vadd.xlane.f32.xlu0 %v986
  %v988 = vpop.xlane.xlu0 %987
  %v989 = vmul.f32 %v988, %v211
  %v990 = vadd.f32 %v954, %v959
  %v991 = vadd.f32 %v964, %v969
  %v992 = vadd.f32 %v974, %v979
  %v993 = vadd.f32 %v984, %v989
  %v994 = vadd.f32 %v990, %v991
  %v995 = vadd.f32 %v992, %v993
  %v996 = vadd.f32 %v994, %v995
  %v998 = vrot.slane %v996, 6
  %v1000 = vadd.f32 %v722, %v998
  %v1001 = vtanh.pop %v1000
  %v1002 = vmul.f32 %v1001, %v117
  %v1003 = vsel %vm315, %v1002, 0.0
  %1004 = vadd.xlane.f32.xlu0 %v1003
  %v1005 = vpop.xlane.xlu0 %1004
  %v1006 = vmul.f32 %v1005, %v176
  %v1007 = vmul.f32 %v1001, %v119
  %v1008 = vsel %vm315, %v1007, 0.0
  %1009 = vadd.xlane.f32.xlu0 %v1008
  %v1010 = vpop.xlane.xlu0 %1009
  %v1011 = vmul.f32 %v1010, %v181
  %v1012 = vmul.f32 %v1001, %v121
  %v1013 = vsel %vm315, %v1012, 0.0
  %1014 = vadd.xlane.f32.xlu0 %v1013
  %v1015 = vpop.xlane.xlu0 %1014
  %v1016 = vmul.f32 %v1015, %v186
  %v1017 = vmul.f32 %v1001, %v123
  %v1018 = vsel %vm315, %v1017, 0.0
  %1019 = vadd.xlane.f32.xlu0 %v1018
  %v1020 = vpop.xlane.xlu0 %1019
  %v1021 = vmul.f32 %v1020, %v191
  %v1022 = vmul.f32 %v1001, %v125
  %v1023 = vsel %vm315, %v1022, 0.0
  %1024 = vadd.xlane.f32.xlu0 %v1023
  %v1025 = vpop.xlane.xlu0 %1024
  %v1026 = vmul.f32 %v1025, %v196
  %v1027 = vmul.f32 %v1001, %v127
  %v1028 = vsel %vm315, %v1027, 0.0
  %1029 = vadd.xlane.f32.xlu0 %v1028
  %v1030 = vpop.xlane.xlu0 %1029
  %v1031 = vmul.f32 %v1030, %v201
  %v1032 = vmul.f32 %v1001, %v129
  %v1033 = vsel %vm315, %v1032, 0.0
  %1034 = vadd.xlane.f32.xlu0 %v1033
  %v1035 = vpop.xlane.xlu0 %1034
  %v1036 = vmul.f32 %v1035, %v206
  %v1037 = vmul.f32 %v1001, %v131
  %v1038 = vsel %vm315, %v1037, 0.0
  %1039 = vadd.xlane.f32.xlu0 %v1038
  %v1040 = vpop.xlane.xlu0 %1039
  %v1041 = vmul.f32 %v1040, %v211
  %v1042 = vadd.f32 %v1006, %v1011
  %v1043 = vadd.f32 %v1016, %v1021
  %v1044 = vadd.f32 %v1026, %v1031
  %v1045 = vadd.f32 %v1036, %v1041
  %v1046 = vadd.f32 %v1042, %v1043
  %v1047 = vadd.f32 %v1044, %v1045
  %v1048 = vadd.f32 %v1046, %v1047
  %v1050 = vrot.slane %v1048, 6
  %v1052 = vadd.f32 %v722, %v1050
  %v1053 = vtanh.pop %v1052
  %v1054 = vmul.f32 %v1053, %v117
  %v1055 = vsel %vm368, %v1054, 0.0
  %1056 = vadd.xlane.f32.xlu0 %v1055
  %v1057 = vpop.xlane.xlu0 %1056
  %v1058 = vmul.f32 %v1057, %v176
  %v1059 = vmul.f32 %v1053, %v119
  %v1060 = vsel %vm368, %v1059, 0.0
  %1061 = vadd.xlane.f32.xlu0 %v1060
  %v1062 = vpop.xlane.xlu0 %1061
  %v1063 = vmul.f32 %v1062, %v181
  %v1064 = vmul.f32 %v1053, %v121
  %v1065 = vsel %vm368, %v1064, 0.0
  %1066 = vadd.xlane.f32.xlu0 %v1065
  %v1067 = vpop.xlane.xlu0 %1066
  %v1068 = vmul.f32 %v1067, %v186
  %v1069 = vmul.f32 %v1053, %v123
  %v1070 = vsel %vm368, %v1069, 0.0
  %1071 = vadd.xlane.f32.xlu0 %v1070
  %v1072 = vpop.xlane.xlu0 %1071
  %v1073 = vmul.f32 %v1072, %v191
  %v1074 = vmul.f32 %v1053, %v125
  %v1075 = vsel %vm368, %v1074, 0.0
  %1076 = vadd.xlane.f32.xlu0 %v1075
  %v1077 = vpop.xlane.xlu0 %1076
  %v1078 = vmul.f32 %v1077, %v196
  %v1079 = vmul.f32 %v1053, %v127
  %v1080 = vsel %vm368, %v1079, 0.0
  %1081 = vadd.xlane.f32.xlu0 %v1080
  %v1082 = vpop.xlane.xlu0 %1081
  %v1083 = vmul.f32 %v1082, %v201
  %v1084 = vmul.f32 %v1053, %v129
  %v1085 = vsel %vm368, %v1084, 0.0
  %1086 = vadd.xlane.f32.xlu0 %v1085
  %v1087 = vpop.xlane.xlu0 %1086
  %v1088 = vmul.f32 %v1087, %v206
  %v1089 = vmul.f32 %v1053, %v131
  %v1090 = vsel %vm368, %v1089, 0.0
  %1091 = vadd.xlane.f32.xlu0 %v1090
  %v1092 = vpop.xlane.xlu0 %1091
  %v1093 = vmul.f32 %v1092, %v211
  %v1094 = vadd.f32 %v1058, %v1063
  %v1095 = vadd.f32 %v1068, %v1073
  %v1096 = vadd.f32 %v1078, %v1083
  %v1097 = vadd.f32 %v1088, %v1093
  %v1098 = vadd.f32 %v1094, %v1095
  %v1099 = vadd.f32 %v1096, %v1097
  %v1100 = vadd.f32 %v1098, %v1099
  %v1102 = vrot.slane %v1100, 6
  %v1104 = vadd.f32 %v722, %v1102
  %v1105 = vtanh.pop %v1104
  %v1106 = vsel %vm629, %v741, %v793
  %v1107 = vsel %vm631, %v1106, %v845
  %v1108 = vsel %vm633, %v1107, %v897
  %v1109 = vsel %vm629, %v949, %v1001
  %v1110 = vsel %vm631, %v1109, %v1053
  %v1111 = vsel %vm633, %v1110, %v1105
  %v1112 = vld [vmem:[%s2] sm:$0xff]
  %1113 = vrot.lane.b32.xlu0 %v642, 120
  %v1114 = vpop.permute.xlu0 %1113
  %v1117 = vsel %vm34, %v1108, 0
  %v1120 = vsel %vm34, %v1111, 0
  %1122 = vmatprep.subr.mxu0 0.0
  %1123 = vmatpush1.msra.mxu0 %v1112
  %1124 = vmatprep.subr.mxu0 0.0
  %1125 = vmatpush1.msra.mxu0 0.0
  %1126 = vmatprep.subr.mxu0 0.0
  %1127 = vmatpush1.msra.mxu0 0.0
  %1128 = vmatprep.subr.mxu0 0.0
  %1129 = vmatpush1.msra.mxu0 0.0
  %1130 = vmatprep.subr.mxu0 0.0
  %1131 = vmatpush1.msra.mxu0 0.0
  %1132 = vmatprep.subr.mxu0 0.0
  %1133 = vmatpush1.msra.mxu0 0.0
  %1134 = vmatprep.subr.mxu0 0.0
  %1135 = vmatpush1.msra.mxu0 0.0
  %1136 = vmatprep.subr.mxu0 0.0
  %1137 = vmatpush1.msra.mxu0 0.0
  %1138 = vmatprep.subr.mxu0 0.0
  %1139 = vmatpush1.msra.mxu0 0.0
  %1140 = vmatprep.subr.mxu0 0.0
  %1141 = vmatpush1.msra.mxu0 0.0
  %1142 = vmatprep.subr.mxu0 0.0
  %1143 = vmatpush1.msra.mxu0 0.0
  %1144 = vmatprep.subr.mxu0 0.0
  %1145 = vmatpush1.msra.mxu0 0.0
  %1146 = vmatprep.subr.mxu0 0.0
  %1147 = vmatpush1.msra.mxu0 0.0
  %1148 = vmatprep.subr.mxu0 0.0
  %1149 = vmatpush1.msra.mxu0 0.0
  %1150 = vmatprep.subr.mxu0 0.0
  %1151 = vmatpush1.msra.mxu0 0.0
  %1152 = vmatprep.subr.mxu0 0.0
  %1153 = vmatpush1.msra.mxu0 0.0
  %1154 = vmatprep.subr.mxu0 0.0
  %1155 = vmatpush1.msra.mxu0 0.0
  %1156 = vmatprep.subr.mxu0 0.0
  %1157 = vmatpush1.msra.mxu0 0.0
  %1158 = vmatprep.subr.mxu0 0.0
  %1159 = vmatpush1.msra.mxu0 0.0
  %1160 = vmatprep.subr.mxu0 0.0
  %1161 = vmatpush1.msra.mxu0 0.0
  %1162 = vmatprep.subr.mxu0 0.0
  %1163 = vmatpush1.msra.mxu0 0.0
  %1164 = vmatprep.subr.mxu0 0.0
  %1165 = vmatpush1.msra.mxu0 0.0
  %1166 = vmatprep.subr.mxu0 0.0
  %1167 = vmatpush1.msra.mxu0 0.0
  %1168 = vmatprep.subr.mxu0 0.0
  %1169 = vmatpush1.msra.mxu0 0.0
  %1170 = vmatprep.subr.mxu0 0.0
  %1171 = vmatpush1.msra.mxu0 0.0
  %1172 = vmatprep.subr.mxu0 0.0
  %1173 = vmatpush1.msra.mxu0 0.0
  %1174 = vmatprep.subr.mxu0 0.0
  %1175 = vmatpush1.msra.mxu0 0.0
  %1176 = vmatprep.subr.mxu0 0.0
  %1177 = vmatpush1.msra.mxu0 0.0
  %1178 = vmatprep.subr.mxu0 0.0
  %1179 = vmatpush1.msra.mxu0 0.0
  %1180 = vmatprep.subr.mxu0 0.0
  %1181 = vmatpush1.msra.mxu0 0.0
  %1182 = vmatprep.subr.mxu0 0.0
  %1183 = vmatpush1.msra.mxu0 0.0
  %1184 = vmatprep.subr.mxu0 0.0
  %1185 = vmatpush1.msra.mxu0 0.0
  %1186 = vmatprep.mubr.f32.mxu0 0.0
  %1187 = vmatmul.mubr.f32.gmra.mrb[0].mxu0 %v1117
  %v1188 = vpop.f32.mrb[0].mxu0
  %v1189 = vadd.f32 %v1114, %v1188
  %v1190 = vpop.f32.mrb[0].mxu0
  %1191 = vmatprep.mubr.f32.mxu0 0.0
  %1192 = vmatmul.mubr.f32.gmra.mrb[0].mxu0 %v1120
  %v1193 = vpop.f32.mrb[0].mxu0
  %v1194 = vadd.f32 %v1114, %v1193
  %v1195 = vpop.f32.mrb[0].mxu0
  %1196 = vdwg.mxu0
  %vm1197 = vcmask 31744
  %1198 = vst.msk [vmem:[%s4] sm:$0xff] %vm1197, %v1189
  %1199 = vst.msk [vmem:[%s4 + $0x8] sm:$0xff] %vm1197, %v1194
  // Predicated region
  $region18: #{model_forward.1} parent=0 // pred_check
    _
  $region19: #{model_forward.1} parent=0 // pred_check_branch
    %1201 = sbr.rel (0) target = $region21
  $region20: #{model_forward.1} parent=0 // pred_region
    _
  $region21: #{model_forward.1} parent=0 // pred_fallthru
    _
  // Predicated region
  $region22: #{model_forward.1} parent=0 // pred_check
    _
  $region23: #{model_forward.1} parent=0 // pred_check_branch
    %1203 = sbr.rel (0) target = $region25
  $region24: #{model_forward.1} parent=0 // pred_region
    _
  $region25: #{model_forward.1} parent=0 // pred_fallthru
    _

</llo_original>
